<compile_context>
chip_gen: v7x
topology: tpu7x:2x2x1
jax: 0.10.0
libtpu: 0.0.40
codegen_flags: <defaults>
</compile_context>

<pallas_src>
import functools

import jax
import jax.numpy as jnp
from jax import lax
from jax.experimental import pallas as pl
from jax.experimental.pallas import tpu as pltpu

HIDDEN = 512
MAX_TILE_B = 1024
_NT_DIMS = (((1,), (1,)), ((), ()))  # contract last dim of lhs with last dim of rhs


def _round_up(n, m):
    return ((n + m - 1) // m) * m


def _choose_tile_b(batch):
    """Batch-tile size: as large as possible (fewest grid steps), multiple of 128.

    On v7x (2 TensorCores/chip) the tile is sized so there are always >= 2 grid
    steps, so the "parallel" batch axis actually feeds both cores.
    """
    try:
        kind = jax.devices()[0].device_kind.lower()
        two_tensorcores = "v7" in kind
    except Exception:  # query failure only affects the v7x two-step heuristic
        two_tensorcores = False
    if two_tensorcores and batch > 128:
        tile = _round_up(pl.cdiv(batch, 2), 128)
    else:
        tile = _round_up(max(batch, 1), 128)
    return max(128, min(MAX_TILE_B, tile))


def soft_q_kernel(xa_ref, w1_ref, b1_ref, w2_ref, b2_ref, w3_ref, b3_ref, out_ref):
    wdt = w1_ref.dtype  # weight dtype (bf16 or f32); biases / accumulation stay f32

    # fc1 (xa already concatenated + cast to the weight dtype in the wrapper).
    h1 = jnp.dot(xa_ref[...], w1_ref[...],
                 preferred_element_type=jnp.float32) + b1_ref[...]
    h1 = jnp.maximum(h1, 0.0)                                    # (tile_b, 512) f32

    # fc2
    h2 = jnp.dot(h1.astype(wdt), w2_ref[...],
                 preferred_element_type=jnp.float32) + b2_ref[...]
    h2 = jnp.maximum(h2, 0.0)                                    # (tile_b, 512) f32

    # fc3: w3 stored as a (1, 512) row; NT dot -> lane-dense (1, tile_b) output.
    q = lax.dot_general(w3_ref[...], h2.astype(wdt), _NT_DIMS,
                        preferred_element_type=jnp.float32)      # (1, tile_b)
    out_ref[...] = q + b3_ref[0]                                 # b3 from SMEM scalar


@functools.partial(jax.jit, static_argnames=("tile_b", "single"))
def _soft_q_impl(x, a, w1, b1, w2, b2, w3, b3, *, tile_b, single):
    wdt = w1.dtype
    xa = jnp.concatenate([x.astype(wdt), a.astype(wdt)], axis=-1)  # (B, in_dim)
    B, in_dim = xa.shape

    num_tiles = pl.cdiv(B, tile_b)
    b_pad = num_tiles * tile_b
    if b_pad != B:
        xa = jnp.pad(xa, ((0, b_pad - B), (0, 0)))

    out = pl.pallas_call(
        soft_q_kernel,
        out_shape=jax.ShapeDtypeStruct((1, b_pad), jnp.float32),
        grid=(num_tiles,),
        in_specs=[
            # Batch-tiled activations.
            pl.BlockSpec((tile_b, in_dim), lambda i: (i, 0)),
            # Weights/biases: constant block (0, 0) -> fetched once, VMEM-resident
            # across the whole batch grid.
            pl.BlockSpec((in_dim, HIDDEN), lambda i: (0, 0)),
            pl.BlockSpec((1, HIDDEN), lambda i: (0, 0)),
            pl.BlockSpec((HIDDEN, HIDDEN), lambda i: (0, 0)),
            pl.BlockSpec((1, HIDDEN), lambda i: (0, 0)),
            pl.BlockSpec((1, HIDDEN), lambda i: (0, 0)),
            # b3 as an SMEM scalar.
            pl.BlockSpec(memory_space=pltpu.MemorySpace.SMEM),
        ],
        # Lane-dense output: one (1, tile_b) row per grid step.
        out_specs=pl.BlockSpec((1, tile_b), lambda i: (0, i)),
        compiler_params=pltpu.CompilerParams(
            dimension_semantics=("parallel",)),
    )(xa, w1, b1, w2, b2, w3, b3)

    q = out[0, :B]                       # (B,), padded rows dropped
    return q if single else q[:, None]   # (1,) for a single sample, else (B, 1)


def init_params(key, in_dim):
    """Deterministic init mimicking torch.nn.Linear default (uniform +-1/sqrt(fan_in)).

    Weights are stored transposed vs. PyTorch: W has shape (in_features, out_features).
    """
    ks = jax.random.split(key, 6)

    def lin(kw, kb, fan_in, fan_out):
        bound = 1.0 / jnp.sqrt(jnp.float32(fan_in))
        w = jax.random.uniform(kw, (fan_in, fan_out), jnp.float32, -bound, bound)
        b = jax.random.uniform(kb, (fan_out,), jnp.float32, -bound, bound)
        return w, b

    w1, b1 = lin(ks[0], ks[1], in_dim, HIDDEN)
    w2, b2 = lin(ks[2], ks[3], HIDDEN, HIDDEN)
    w3, b3 = lin(ks[4], ks[5], HIDDEN, 1)
    return w1, b1, w2, b2, w3, b3


def prepare_params(params, weight_dtype=jnp.bfloat16):
    """One-time re-layout of parameters into the kernel's preferred format.

    bf16 weights are the recommended default on every generation (v5e/v6e/v7x):
    the MXU is bf16-native, f32 operands run as slower multi-pass matmuls, and
    weight HBM->VMEM traffic is halved.  Biases stay f32; accumulation is f32.
    """
    w1, b1, w2, b2, w3, b3 = params
    wdt = weight_dtype
    return dict(
        w1=jnp.asarray(w1, wdt),                       # (in_dim, 512)
        b1=jnp.asarray(b1, jnp.float32).reshape(1, HIDDEN),
        w2=jnp.asarray(w2, wdt),                       # (512, 512)
        b2=jnp.asarray(b2, jnp.float32).reshape(1, HIDDEN),
        w3=jnp.asarray(w3, wdt).reshape(1, HIDDEN),    # (1, 512) row
        b3=jnp.asarray(b3, jnp.float32).reshape(1),    # SMEM scalar
    )


def soft_q_forward(x, a, kparams, *, tile_b=None):
    """Forward pass. x: (B, obs_dim) or (obs_dim,); a: (B, act_dim) or (act_dim,).

    Returns (B, 1) for batched input, (1,) for a single sample (matching the
    unbatched PyTorch module output shape).
    """
    x = jnp.asarray(x)
    a = jnp.asarray(a)
    single = x.ndim == 1
    if single:
        x, a = x[None, :], a[None, :]
    if tile_b is None:
        tile_b = _choose_tile_b(x.shape[0])
    return _soft_q_impl(x, a, kparams["w1"], kparams["b1"], kparams["w2"],
                        kparams["b2"], kparams["w3"], kparams["b3"],
                        tile_b=int(tile_b), single=single)


def soft_q_reference(x, a, params):
    w1, b1, w2, b2, w3, b3 = params
    x2 = jnp.atleast_2d(jnp.asarray(x, jnp.float32))
    a2 = jnp.atleast_2d(jnp.asarray(a, jnp.float32))
    xa = jnp.concatenate([x2, a2], axis=-1)
    h1 = jnp.maximum(xa @ w1 + b1, 0.0)
    h2 = jnp.maximum(h1 @ w2 + b2, 0.0)
    return h2 @ w3 + b3            # (B, 1)


if __name__ == "__main__":
    # Small synthetic env dims: observation_space -> (24,), action_space -> (8,)
    obs_dim, act_dim = 24, 8
    in_dim = obs_dim + act_dim

    key = jax.random.PRNGKey(0)
    k_params, k_x, k_a = jax.random.split(key, 3)
    params = init_params(k_params, in_dim)

    # Batched inputs; B deliberately not a multiple of 128 to exercise padding.
    B = 200
    xb = jax.random.normal(k_x, (B, obs_dim), jnp.float32)
    ab = jax.random.normal(k_a, (B, act_dim), jnp.float32)
    q_ref = soft_q_reference(xb, ab, params)

    # f32 weights: exact match with the PyTorch-style reference.
    kp_f32 = prepare_params(params, jnp.float32)
    q = jax.block_until_ready(soft_q_forward(xb, ab, kp_f32))
    assert q.shape == (B, 1), q.shape
    assert jnp.allclose(q, q_ref, atol=1e-3, rtol=1e-3)

    # Single-sample path (same kernel; matches the unbatched PyTorch forward: shape (1,)).
    q1 = jax.block_until_ready(soft_q_forward(xb[0], ab[0], kp_f32))
    assert q1.shape == (1,), q1.shape
    assert jnp.allclose(q1, q_ref[0], atol=1e-3, rtol=1e-3)

    # bf16-weight default (all generations); relative-error-on-norm check.
    kp_bf16 = prepare_params(params)  # bf16 weights
    q_bf = jax.block_until_ready(soft_q_forward(xb, ab, kp_bf16))
    assert q_bf.shape == (B, 1), q_bf.shape
    assert bool(jnp.all(jnp.isfinite(q_bf)))
    rel = jnp.linalg.norm(q_bf - q_ref) / (jnp.linalg.norm(q_ref) + 1e-6)
    assert float(rel) < 5e-2, float(rel)

    # Larger replay-style batch: exercises the big-tile / multi-grid-step path.
    B2 = 4096
    xb2 = jax.random.normal(k_x, (B2, obs_dim), jnp.float32)
    ab2 = jax.random.normal(k_a, (B2, act_dim), jnp.float32)
    q2 = jax.block_until_ready(soft_q_forward(xb2, ab2, kp_bf16))
    assert q2.shape == (B2, 1), q2.shape
    q2_ref = soft_q_reference(xb2, ab2, params)
    rel2 = jnp.linalg.norm(q2 - q2_ref) / (jnp.linalg.norm(q2_ref) + 1e-6)
    assert float(rel2) < 5e-2, float(rel2)

    print("KERNEL_OK")
</pallas_src>

<mosaic_0001>
module attributes {stable_mosaic.version = 11 : i64} {
  func.func @soft_q_kernel(%arg0: i32, %arg1: memref<256x32xf32, #tpu.memory_space<vmem>>, %arg2: memref<32x512xf32, #tpu.memory_space<vmem>>, %arg3: memref<1x512xf32, #tpu.memory_space<vmem>>, %arg4: memref<512x512xf32, #tpu.memory_space<vmem>>, %arg5: memref<1x512xf32, #tpu.memory_space<vmem>>, %arg6: memref<1x512xf32, #tpu.memory_space<vmem>>, %arg7: memref<1xf32, #tpu.memory_space<smem>>, %arg8: memref<1x256xf32, #tpu.memory_space<vmem>>) attributes {dimension_semantics = [#tpu.dimension_semantics<parallel>], iteration_bounds = array<i64: 1>, scalar_prefetch = 0 : i64, scratch_operands = 0 : i64, tpu.core_type = #tpu.core_type<tc>, window_params = [{transform_indices = @transform_0, window_bounds = array<i64: 256, 32>}, {pipeline_mode = #tpu.pipeline_mode<synchronous>, transform_indices = @transform_1, window_bounds = array<i64: 32, 512>}, {pipeline_mode = #tpu.pipeline_mode<synchronous>, transform_indices = @transform_2, window_bounds = array<i64: 1, 512>}, {pipeline_mode = #tpu.pipeline_mode<synchronous>, transform_indices = @transform_3, window_bounds = array<i64: 512, 512>}, {pipeline_mode = #tpu.pipeline_mode<synchronous>, transform_indices = @transform_4, window_bounds = array<i64: 1, 512>}, {pipeline_mode = #tpu.pipeline_mode<synchronous>, transform_indices = @transform_5, window_bounds = array<i64: 1, 512>}, {transform_indices = @transform_6, window_bounds = array<i64: 1>}, {transform_indices = @transform_7, window_bounds = array<i64: 1, 256>}]} {
    %c0 = arith.constant 0 : index
    %c0_0 = arith.constant 0 : index
    %0 = vector.load %arg1[%c0, %c0_0] : memref<256x32xf32, #tpu.memory_space<vmem>>, vector<256x32xf32>
    %c0_1 = arith.constant 0 : index
    %c0_2 = arith.constant 0 : index
    %1 = vector.load %arg2[%c0_1, %c0_2] : memref<32x512xf32, #tpu.memory_space<vmem>>, vector<32x512xf32>
    %cst = arith.constant dense<0.000000e+00> : vector<256x512xf32>
    %2 = tpu.matmul %0, %1, %cst {dimension_numbers = #tpu.dot_dimension_numbers<[1], [0], [0], [1], [0, 0, 1, 1], [], []>} : vector<256x32xf32>, vector<32x512xf32>, vector<256x512xf32> -> vector<256x512xf32>
    %c0_3 = arith.constant 0 : index
    %c0_4 = arith.constant 0 : index
    %3 = vector.load %arg3[%c0_3, %c0_4] : memref<1x512xf32, #tpu.memory_space<vmem>>, vector<1x512xf32>
    %4 = vector.broadcast %3 : vector<1x512xf32> to vector<256x512xf32>
    %5 = arith.addf %2, %4 : vector<256x512xf32>
    %cst_5 = arith.constant 0.000000e+00 : f32
    %6 = vector.broadcast %cst_5 : f32 to vector<256x512xf32>
    %7 = arith.maximumf %5, %6 : vector<256x512xf32>
    %c0_6 = arith.constant 0 : index
    %c0_7 = arith.constant 0 : index
    %8 = vector.load %arg4[%c0_6, %c0_7] : memref<512x512xf32, #tpu.memory_space<vmem>>, vector<512x512xf32>
    %cst_8 = arith.constant dense<0.000000e+00> : vector<256x512xf32>
    %9 = tpu.matmul %7, %8, %cst_8 {dimension_numbers = #tpu.dot_dimension_numbers<[1], [0], [0], [1], [0, 0, 1, 1], [], []>} : vector<256x512xf32>, vector<512x512xf32>, vector<256x512xf32> -> vector<256x512xf32>
    %c0_9 = arith.constant 0 : index
    %c0_10 = arith.constant 0 : index
    %10 = vector.load %arg5[%c0_9, %c0_10] : memref<1x512xf32, #tpu.memory_space<vmem>>, vector<1x512xf32>
    %11 = vector.broadcast %10 : vector<1x512xf32> to vector<256x512xf32>
    %12 = arith.addf %9, %11 : vector<256x512xf32>
    %cst_11 = arith.constant 0.000000e+00 : f32
    %13 = vector.broadcast %cst_11 : f32 to vector<256x512xf32>
    %14 = arith.maximumf %12, %13 : vector<256x512xf32>
    %c0_12 = arith.constant 0 : index
    %c0_13 = arith.constant 0 : index
    %15 = vector.load %arg6[%c0_12, %c0_13] : memref<1x512xf32, #tpu.memory_space<vmem>>, vector<1x512xf32>
    %cst_14 = arith.constant dense<0.000000e+00> : vector<1x256xf32>
    %16 = tpu.matmul %15, %14, %cst_14 {dimension_numbers = #tpu.dot_dimension_numbers<[1], [1], [0], [0], [0, 0, 1, 0], [], []>} : vector<1x512xf32>, vector<256x512xf32>, vector<1x256xf32> -> vector<1x256xf32>
    %c0_15 = arith.constant 0 : index
    %17 = memref.load %arg7[%c0_15] : memref<1xf32, #tpu.memory_space<smem>>
    %18 = vector.broadcast %17 : f32 to vector<1x256xf32>
    %19 = arith.addf %16, %18 : vector<1x256xf32>
    %c0_16 = arith.constant 0 : index
    %c0_17 = arith.constant 0 : index
    %20 = vector.load %arg8[%c0_16, %c0_17] : memref<1x256xf32, #tpu.memory_space<vmem>>, vector<1x256xf32>
    tpu.vector_store %arg8[%c0_16, %c0_17], %19 {strides = array<i32>} : memref<1x256xf32, #tpu.memory_space<vmem>>, vector<1x256xf32>,
    return
  }
  func.func @transform_0(%arg0: i32) -> (i32, i32) {
    %c0_i32 = arith.constant 0 : i32
    %c0_i32_0 = arith.constant 0 : i32
    return %arg0, %c0_i32 : i32, i32
  }
  func.func @transform_1(%arg0: i32) -> (i32, i32) {
    %c0_i32 = arith.constant 0 : i32
    %c0_i32_0 = arith.constant 0 : i32
    %c0_i32_1 = arith.constant 0 : i32
    return %c0_i32, %c0_i32_0 : i32, i32
  }
  func.func @transform_2(%arg0: i32) -> (i32, i32) {
    %c0_i32 = arith.constant 0 : i32
    %c0_i32_0 = arith.constant 0 : i32
    %c0_i32_1 = arith.constant 0 : i32
    return %c0_i32, %c0_i32_0 : i32, i32
  }
  func.func @transform_3(%arg0: i32) -> (i32, i32) {
    %c0_i32 = arith.constant 0 : i32
    %c0_i32_0 = arith.constant 0 : i32
    %c0_i32_1 = arith.constant 0 : i32
    return %c0_i32, %c0_i32_0 : i32, i32
  }
  func.func @transform_4(%arg0: i32) -> (i32, i32) {
    %c0_i32 = arith.constant 0 : i32
    %c0_i32_0 = arith.constant 0 : i32
    %c0_i32_1 = arith.constant 0 : i32
    return %c0_i32, %c0_i32_0 : i32, i32
  }
  func.func @transform_5(%arg0: i32) -> (i32, i32) {
    %c0_i32 = arith.constant 0 : i32
    %c0_i32_0 = arith.constant 0 : i32
    %c0_i32_1 = arith.constant 0 : i32
    return %c0_i32, %c0_i32_0 : i32, i32
  }
  func.func @transform_6(%arg0: i32) -> i32 {
    %c0_i32 = arith.constant 0 : i32
    %c0_i32_0 = arith.constant 0 : i32
    return %c0_i32 : i32
  }
  func.func @transform_7(%arg0: i32) -> (i32, i32) {
    %c0_i32 = arith.constant 0 : i32
    %c0_i32_0 = arith.constant 0 : i32
    return %c0_i32, %arg0 : i32, i32
  }
}

</mosaic_0001>

<llo_original>
// kernel: _soft_q_impl.1
$region0: #{_soft_q_impl.1}
  #allocation0 [shape = 'u32[]', space=smem, size = 0x4, offset = 0x4, fixed_abs, tag = 'smem constant byte address 0x4 - core index']
  #allocation1 [shape = 'u32[144,128]{1,0:T(1,128)}', space=vmem, size = 0x12000, scoped, tag = 'internal scratch']
  #allocation2 [shape = 'f32[1]{0:T(128)S(6)}', space=smem, size = 0x200, scoped, tag = 'scoped memory for _soft_q_impl.1']
  %s0 = inlined_call_operand.vmem [shape: f32[256,32], index: 0, kind: input, shape index: {}]
  %s1 = inlined_call_operand.vmem [shape: f32[32,512], index: 1, kind: input, shape index: {}]
  %s2 = inlined_call_operand.vmem [shape: f32[1,512], index: 2, kind: input, shape index: {}]
  %s3 = inlined_call_operand.hbm [shape: f32[512,512], index: 3, kind: input, shape index: {}]
  %s4 = inlined_call_operand.vmem [shape: f32[1,512], index: 4, kind: input, shape index: {}]
  %s5 = inlined_call_operand.vmem [shape: f32[1,512], index: 5, kind: input, shape index: {}]
  %s6 = inlined_call_operand.<no memory space> [shape: f32[1], index: 6, kind: input, shape index: {}]
  %s7 = inlined_call_operand.vmem [shape: f32[1,256], index: 7, kind: output, shape index: {}]
  %s8 = sld [smem:[#allocation0]]
  $region42: #{_soft_q_impl.1} parent=0
    _
  %s10 = ssub.s32 1, %s8
  %s11 = scalar_select 0, %s10, %s8
  %12 = sst [smem:[#allocation2]] %s6
  $region1: #{_soft_q_impl.1} parent=0
    #allocation3 [shape = 'u8[1048576]{0}', space=vmem, size = 0x100000, scoped, tag = 'input window, operand 3, single buffered']
    #allocation4 [shape = 's32[1]{0}', space=sflag, size = 0x4, scoped, tag = 'scoped memory for _soft_q_impl.1']
    %13 = vsyncpa [#allocation4], 0
    // Predicated region
    $region2: #{_soft_q_impl.1} parent=1 // pred_check
      _
    $region3: #{_soft_q_impl.1} parent=1 // pred_check_branch
      %15 = sbr.rel (0) target = $region5
    $region4: #{_soft_q_impl.1} parent=1 // pred_region
      _
    $region5: #{_soft_q_impl.1} parent=1 // pred_fallthru
      _
    // Predicated region
    $region6: #{_soft_q_impl.1} parent=1 // pred_check
      _
    $region7: #{_soft_q_impl.1} parent=1 // pred_check_branch
      %17 = sbr.rel (0) target = $region9
    $region8: #{_soft_q_impl.1} parent=1 // pred_region
      _
    $region9: #{_soft_q_impl.1} parent=1 // pred_fallthru
      _
    // Predicated region
    $region10: #{_soft_q_impl.1} parent=1 // pred_check
      _
    $region11: #{_soft_q_impl.1} parent=1 // pred_check_branch
      %19 = sbr.rel (0) target = $region13
    $region12: #{_soft_q_impl.1} parent=1 // pred_region
      _
    $region13: #{_soft_q_impl.1} parent=1 // pred_fallthru
      _
    // Predicated region
    $region14: #{_soft_q_impl.1} parent=1 // pred_check
      _
    $region15: #{_soft_q_impl.1} parent=1 // pred_check_branch
      %21 = sbr.rel (0) target = $region17
    $region16: #{_soft_q_impl.1} parent=1 // pred_region
      %s23 = ssub.s32 32768, 32768
      %24 = vsyncadd [#allocation4], %s23
      %s25 = sshll.u32 [#allocation3], 4
      %s26 = int_to_ptr.vmem [resolvable:$true] %s25
      %31 = dma.hbm_to_vmem [thread:$0]  %s3, 32768, %s26, [#allocation4], 512, 512, 32
    $region17: #{_soft_q_impl.1} parent=1 // pred_fallthru
      _
    // Predicated region
    $region18: #{_soft_q_impl.1} parent=1 // pred_check
      _
    $region19: #{_soft_q_impl.1} parent=1 // pred_check_branch
      %33 = sbr.rel (0) target = $region21
    $region20: #{_soft_q_impl.1} parent=1 // pred_region
      _
    $region21: #{_soft_q_impl.1} parent=1 // pred_fallthru
      _
    // Predicated region
    $region22: #{_soft_q_impl.1} parent=1 // pred_check
      _
    $region23: #{_soft_q_impl.1} parent=1 // pred_check_branch
      %35 = sbr.rel (0) target = $region25
    $region24: #{_soft_q_impl.1} parent=1 // pred_region
      _
    $region25: #{_soft_q_impl.1} parent=1 // pred_fallthru
      _
    // Predicated region
    $region26: #{_soft_q_impl.1} parent=1 // pred_check
      _
    $region27: #{_soft_q_impl.1} parent=1 // pred_check_branch
      %37 = sbr.rel (0) target = $region29
    $region28: #{_soft_q_impl.1} parent=1 // pred_region
      _
    $region29: #{_soft_q_impl.1} parent=1 // pred_fallthru
      _
    // Predicated region
    $region30: #{_soft_q_impl.1} parent=1 // pred_check
      _
    $region31: #{_soft_q_impl.1} parent=1 // pred_check_branch
      %39 = sbr.rel (0) target = $region33
    $region32: #{_soft_q_impl.1} parent=1 // pred_region
      %40 = dma.done [#allocation4], 32768
    $region33: #{_soft_q_impl.1} parent=1 // pred_fallthru
      _
    %v41 = vld [vmem:[%s0] sm:$0xff]
    %v42 = vld [vmem:[%s0 + $0x8] sm:$0xff]
    %v43 = vld [vmem:[%s0 + $0x10] sm:$0xff]
    %v44 = vld [vmem:[%s0 + $0x18] sm:$0xff]
    %v45 = vld [vmem:[%s0 + $0x20] sm:$0xff]
    %v46 = vld [vmem:[%s0 + $0x28] sm:$0xff]
    %v47 = vld [vmem:[%s0 + $0x30] sm:$0xff]
    %v48 = vld [vmem:[%s0 + $0x38] sm:$0xff]
    %v49 = vld [vmem:[%s0 + $0x40] sm:$0xff]
    %v50 = vld [vmem:[%s0 + $0x48] sm:$0xff]
    %v51 = vld [vmem:[%s0 + $0x50] sm:$0xff]
    %v52 = vld [vmem:[%s0 + $0x58] sm:$0xff]
    %v53 = vld [vmem:[%s0 + $0x60] sm:$0xff]
    %v54 = vld [vmem:[%s0 + $0x68] sm:$0xff]
    %v55 = vld [vmem:[%s0 + $0x70] sm:$0xff]
    %v56 = vld [vmem:[%s0 + $0x78] sm:$0xff]
    %v57 = vld [vmem:[%s0 + $0x80] sm:$0xff]
    %v58 = vld [vmem:[%s0 + $0x88] sm:$0xff]
    %v59 = vld [vmem:[%s0 + $0x90] sm:$0xff]
    %v60 = vld [vmem:[%s0 + $0x98] sm:$0xff]
    %v61 = vld [vmem:[%s0 + $0xa0] sm:$0xff]
    %v62 = vld [vmem:[%s0 + $0xa8] sm:$0xff]
    %v63 = vld [vmem:[%s0 + $0xb0] sm:$0xff]
    %v64 = vld [vmem:[%s0 + $0xb8] sm:$0xff]
    %v65 = vld [vmem:[%s0 + $0xc0] sm:$0xff]
    %v66 = vld [vmem:[%s0 + $0xc8] sm:$0xff]
    %v67 = vld [vmem:[%s0 + $0xd0] sm:$0xff]
    %v68 = vld [vmem:[%s0 + $0xd8] sm:$0xff]
    %v69 = vld [vmem:[%s0 + $0xe0] sm:$0xff]
    %v70 = vld [vmem:[%s0 + $0xe8] sm:$0xff]
    %v71 = vld [vmem:[%s0 + $0xf0] sm:$0xff]
    %v72 = vld [vmem:[%s0 + $0xf8] sm:$0xff]
    %v73 = vld [vmem:[%s1] sm:$0xff]
    %v74 = vld [vmem:[%s1 + $0x8] sm:$0xff]
    %v75 = vld [vmem:[%s1 + $0x10] sm:$0xff]
    %v76 = vld [vmem:[%s1 + $0x18] sm:$0xff]
    %v77 = vld [vmem:[%s1 + $0x20] sm:$0xff]
    %v78 = vld [vmem:[%s1 + $0x28] sm:$0xff]
    %v79 = vld [vmem:[%s1 + $0x30] sm:$0xff]
    %v80 = vld [vmem:[%s1 + $0x38] sm:$0xff]
    %v81 = vld [vmem:[%s1 + $0x40] sm:$0xff]
    %v82 = vld [vmem:[%s1 + $0x48] sm:$0xff]
    %v83 = vld [vmem:[%s1 + $0x50] sm:$0xff]
    %v84 = vld [vmem:[%s1 + $0x58] sm:$0xff]
    %v85 = vld [vmem:[%s1 + $0x60] sm:$0xff]
    %v86 = vld [vmem:[%s1 + $0x68] sm:$0xff]
    %v87 = vld [vmem:[%s1 + $0x70] sm:$0xff]
    %v88 = vld [vmem:[%s1 + $0x78] sm:$0xff]
    %v89 = vld [vmem:[%s2] sm:$0xf]
    %v91 = vlaneseq
    %v92 = vshrl.u32 %v91, 7
    %v93 = vsub.s32 0, %v92
    %v94 = vrot.slane %v89, %v93
    %v95 = vlaneseq
    %v96 = vshrl.u32 %v95, 7
    %v97 = vsub.s32 1, %v96
    %v98 = vrot.slane %v89, %v97
    %v99 = vlaneseq
    %v100 = vshrl.u32 %v99, 7
    %v101 = vsub.s32 2, %v100
    %v102 = vrot.slane %v89, %v101
    %v103 = vlaneseq
    %v104 = vshrl.u32 %v103, 7
    %v105 = vsub.s32 3, %v104
    %v106 = vrot.slane %v89, %v105
    %vm111 = vcmask 261120
    %v113 = vsel %vm111, %v41, 0
    %v116 = vsel %vm111, %v42, 0
    %v119 = vsel %vm111, %v43, 0
    %v122 = vsel %vm111, %v44, 0
    %v125 = vsel %vm111, %v45, 0
    %v128 = vsel %vm111, %v46, 0
    %v131 = vsel %vm111, %v47, 0
    %v134 = vsel %vm111, %v48, 0
    %v137 = vsel %vm111, %v49, 0
    %v140 = vsel %vm111, %v50, 0
    %v143 = vsel %vm111, %v51, 0
    %v146 = vsel %vm111, %v52, 0
    %v149 = vsel %vm111, %v53, 0
    %v152 = vsel %vm111, %v54, 0
    %v155 = vsel %vm111, %v55, 0
    %v158 = vsel %vm111, %v56, 0
    %v161 = vsel %vm111, %v57, 0
    %v164 = vsel %vm111, %v58, 0
    %v167 = vsel %vm111, %v59, 0
    %v170 = vsel %vm111, %v60, 0
    %v173 = vsel %vm111, %v61, 0
    %v176 = vsel %vm111, %v62, 0
    %v179 = vsel %vm111, %v63, 0
    %v182 = vsel %vm111, %v64, 0
    %v185 = vsel %vm111, %v65, 0
    %v188 = vsel %vm111, %v66, 0
    %v191 = vsel %vm111, %v67, 0
    %v194 = vsel %vm111, %v68, 0
    %v197 = vsel %vm111, %v69, 0
    %v200 = vsel %vm111, %v70, 0
    %v203 = vsel %vm111, %v71, 0
    %v206 = vsel %vm111, %v72, 0
    %208 = vmatprep.subr.mxu0 %v74
    %209 = vmatpush1.msra.mxu0 %v73
    %210 = vmatprep.subr.mxu0 %v78
    %211 = vmatpush1.msra.mxu0 %v77
    %212 = vmatprep.subr.mxu0 %v82
    %213 = vmatpush1.msra.mxu0 %v81
    %214 = vmatprep.subr.mxu0 %v86
    %215 = vmatpush1.msra.mxu0 %v85
    %216 = vmatprep.subr.mxu0 0.0
    %217 = vmatpush1.msra.mxu0 0.0
    %218 = vmatprep.subr.mxu0 0.0
    %219 = vmatpush1.msra.mxu0 0.0
    %220 = vmatprep.subr.mxu0 0.0
    %221 = vmatpush1.msra.mxu0 0.0
    %222 = vmatprep.subr.mxu0 0.0
    %223 = vmatpush1.msra.mxu0 0.0
    %224 = vmatprep.subr.mxu0 0.0
    %225 = vmatpush1.msra.mxu0 0.0
    %226 = vmatprep.subr.mxu0 0.0
    %227 = vmatpush1.msra.mxu0 0.0
    %228 = vmatprep.subr.mxu0 0.0
    %229 = vmatpush1.msra.mxu0 0.0
    %230 = vmatprep.subr.mxu0 0.0
    %231 = vmatpush1.msra.mxu0 0.0
    %232 = vmatprep.subr.mxu0 0.0
    %233 = vmatpush1.msra.mxu0 0.0
    %234 = vmatprep.subr.mxu0 0.0
    %235 = vmatpush1.msra.mxu0 0.0
    %236 = vmatprep.subr.mxu0 0.0
    %237 = vmatpush1.msra.mxu0 0.0
    %238 = vmatprep.subr.mxu0 0.0
    %239 = vmatpush1.msra.mxu0 0.0
    %240 = vmatprep.subr.mxu0 0.0
    %241 = vmatpush1.msra.mxu0 0.0
    %242 = vmatprep.subr.mxu0 0.0
    %243 = vmatpush1.msra.mxu0 0.0
    %244 = vmatprep.subr.mxu0 0.0
    %245 = vmatpush1.msra.mxu0 0.0
    %246 = vmatprep.subr.mxu0 0.0
    %247 = vmatpush1.msra.mxu0 0.0
    %248 = vmatprep.subr.mxu0 0.0
    %249 = vmatpush1.msra.mxu0 0.0
    %250 = vmatprep.subr.mxu0 0.0
    %251 = vmatpush1.msra.mxu0 0.0
    %252 = vmatprep.subr.mxu0 0.0
    %253 = vmatpush1.msra.mxu0 0.0
    %254 = vmatprep.subr.mxu0 0.0
    %255 = vmatpush1.msra.mxu0 0.0
    %256 = vmatprep.subr.mxu0 0.0
    %257 = vmatpush1.msra.mxu0 0.0
    %258 = vmatprep.subr.mxu0 0.0
    %259 = vmatpush1.msra.mxu0 0.0
    %260 = vmatprep.subr.mxu0 0.0
    %261 = vmatpush1.msra.mxu0 0.0
    %262 = vmatprep.subr.mxu0 0.0
    %263 = vmatpush1.msra.mxu0 0.0
    %264 = vmatprep.subr.mxu0 0.0
    %265 = vmatpush1.msra.mxu0 0.0
    %266 = vmatprep.subr.mxu0 0.0
    %267 = vmatpush1.msra.mxu0 0.0
    %268 = vmatprep.subr.mxu0 0.0
    %269 = vmatpush1.msra.mxu0 0.0
    %270 = vmatprep.subr.mxu0 0.0
    %271 = vmatpush1.msra.mxu0 0.0
    %272 = vmatprep.mubr.f32.mxu0 0.0
    %273 = vmatmul.mubr.f32.gmra.mrb[0].mxu0 %v113
    %v274 = vpop.f32.mrb[0].mxu0
    %v275 = vadd.f32 %v94, %v274
    %v276 = vpop.f32.mrb[0].mxu0
    %v277 = vadd.f32 %v98, %v276
    %278 = vmatprep.mubr.f32.mxu0 0.0
    %279 = vmatmul.mubr.f32.gmra.mrb[0].mxu0 %v116
    %v280 = vpop.f32.mrb[0].mxu0
    %v281 = vadd.f32 %v94, %v280
    %v282 = vpop.f32.mrb[0].mxu0
    %v283 = vadd.f32 %v98, %v282
    %284 = vmatprep.mubr.f32.mxu0 0.0
    %285 = vmatmul.mubr.f32.gmra.mrb[0].mxu0 %v119
    %v286 = vpop.f32.mrb[0].mxu0
    %v287 = vadd.f32 %v94, %v286
    %v288 = vpop.f32.mrb[0].mxu0
    %v289 = vadd.f32 %v98, %v288
    %290 = vmatprep.mubr.f32.mxu0 0.0
    %291 = vmatmul.mubr.f32.gmra.mrb[0].mxu0 %v122
    %v292 = vpop.f32.mrb[0].mxu0
    %v293 = vadd.f32 %v94, %v292
    %v294 = vpop.f32.mrb[0].mxu0
    %v295 = vadd.f32 %v98, %v294
    %296 = vmatprep.mubr.f32.mxu0 0.0
    %297 = vmatmul.mubr.f32.gmra.mrb[0].mxu0 %v125
    %v298 = vpop.f32.mrb[0].mxu0
    %v299 = vadd.f32 %v94, %v298
    %v300 = vpop.f32.mrb[0].mxu0
    %v301 = vadd.f32 %v98, %v300
    %302 = vmatprep.mubr.f32.mxu0 0.0
    %303 = vmatmul.mubr.f32.gmra.mrb[0].mxu0 %v128
    %v304 = vpop.f32.mrb[0].mxu0
    %v305 = vadd.f32 %v94, %v304
    %v306 = vpop.f32.mrb[0].mxu0
    %v307 = vadd.f32 %v98, %v306
    %308 = vmatprep.mubr.f32.mxu0 0.0
    %309 = vmatmul.mubr.f32.gmra.mrb[0].mxu0 %v131
    %v310 = vpop.f32.mrb[0].mxu0
    %v311 = vadd.f32 %v94, %v310
    %v312 = vpop.f32.mrb[0].mxu0
    %v313 = vadd.f32 %v98, %v312
    %314 = vmatprep.mubr.f32.mxu0 0.0
    %315 = vmatmul.mubr.f32.gmra.mrb[0].mxu0 %v134
    %v316 = vpop.f32.mrb[0].mxu0
    %v317 = vadd.f32 %v94, %v316
    %v318 = vpop.f32.mrb[0].mxu0
    %v319 = vadd.f32 %v98, %v318
    %320 = vmatprep.mubr.f32.mxu0 0.0
    %321 = vmatmul.mubr.f32.gmra.mrb[0].mxu0 %v137
    %v322 = vpop.f32.mrb[0].mxu0
    %v323 = vadd.f32 %v94, %v322
    %v324 = vpop.f32.mrb[0].mxu0
    %v325 = vadd.f32 %v98, %v324
    %326 = vmatprep.mubr.f32.mxu0 0.0
    %327 = vmatmul.mubr.f32.gmra.mrb[0].mxu0 %v140
    %v328 = vpop.f32.mrb[0].mxu0
    %v329 = vadd.f32 %v94, %v328
    %v330 = vpop.f32.mrb[0].mxu0
    %v331 = vadd.f32 %v98, %v330
    %332 = vmatprep.mubr.f32.mxu0 0.0
    %333 = vmatmul.mubr.f32.gmra.mrb[0].mxu0 %v143
    %v334 = vpop.f32.mrb[0].mxu0
    %v335 = vadd.f32 %v94, %v334
    %v336 = vpop.f32.mrb[0].mxu0
    %v337 = vadd.f32 %v98, %v336
    %338 = vmatprep.mubr.f32.mxu0 0.0
    %339 = vmatmul.mubr.f32.gmra.mrb[0].mxu0 %v146
    %v340 = vpop.f32.mrb[0].mxu0
    %v341 = vadd.f32 %v94, %v340
    %v342 = vpop.f32.mrb[0].mxu0
    %v343 = vadd.f32 %v98, %v342
    %344 = vmatprep.mubr.f32.mxu0 0.0
    %345 = vmatmul.mubr.f32.gmra.mrb[0].mxu0 %v149
    %v346 = vpop.f32.mrb[0].mxu0
    %v347 = vadd.f32 %v94, %v346
    %v348 = vpop.f32.mrb[0].mxu0
    %v349 = vadd.f32 %v98, %v348
    %350 = vmatprep.mubr.f32.mxu0 0.0
    %351 = vmatmul.mubr.f32.gmra.mrb[0].mxu0 %v152
    %v352 = vpop.f32.mrb[0].mxu0
    %v353 = vadd.f32 %v94, %v352
    %v354 = vpop.f32.mrb[0].mxu0
    %v355 = vadd.f32 %v98, %v354
    %356 = vmatprep.mubr.f32.mxu0 0.0
    %357 = vmatmul.mubr.f32.gmra.mrb[0].mxu0 %v155
    %v358 = vpop.f32.mrb[0].mxu0
    %v359 = vadd.f32 %v94, %v358
    %v360 = vpop.f32.mrb[0].mxu0
    %v361 = vadd.f32 %v98, %v360
    %362 = vmatprep.mubr.f32.mxu0 0.0
    %363 = vmatmul.mubr.f32.gmra.mrb[0].mxu0 %v158
    %v364 = vpop.f32.mrb[0].mxu0
    %v365 = vadd.f32 %v94, %v364
    %v366 = vpop.f32.mrb[0].mxu0
    %v367 = vadd.f32 %v98, %v366
    %368 = vmatprep.mubr.f32.mxu0 0.0
    %369 = vmatmul.mubr.f32.gmra.mrb[0].mxu0 %v161
    %v370 = vpop.f32.mrb[0].mxu0
    %v371 = vadd.f32 %v94, %v370
    %v372 = vpop.f32.mrb[0].mxu0
    %v373 = vadd.f32 %v98, %v372
    %374 = vmatprep.mubr.f32.mxu0 0.0
    %375 = vmatmul.mubr.f32.gmra.mrb[0].mxu0 %v164
    %v376 = vpop.f32.mrb[0].mxu0
    %v377 = vadd.f32 %v94, %v376
    %v378 = vpop.f32.mrb[0].mxu0
    %v379 = vadd.f32 %v98, %v378
    %380 = vmatprep.mubr.f32.mxu0 0.0
    %381 = vmatmul.mubr.f32.gmra.mrb[0].mxu0 %v167
    %v382 = vpop.f32.mrb[0].mxu0
    %v383 = vadd.f32 %v94, %v382
    %v384 = vpop.f32.mrb[0].mxu0
    %v385 = vadd.f32 %v98, %v384
    %386 = vmatprep.mubr.f32.mxu0 0.0
    %387 = vmatmul.mubr.f32.gmra.mrb[0].mxu0 %v170
    %v388 = vpop.f32.mrb[0].mxu0
    %v389 = vadd.f32 %v94, %v388
    %v390 = vpop.f32.mrb[0].mxu0
    %v391 = vadd.f32 %v98, %v390
    %392 = vmatprep.mubr.f32.mxu0 0.0
    %393 = vmatmul.mubr.f32.gmra.mrb[0].mxu0 %v173
    %v394 = vpop.f32.mrb[0].mxu0
    %v395 = vadd.f32 %v94, %v394
    %v396 = vpop.f32.mrb[0].mxu0
    %v397 = vadd.f32 %v98, %v396
    %398 = vmatprep.mubr.f32.mxu0 0.0
    %399 = vmatmul.mubr.f32.gmra.mrb[0].mxu0 %v176
    %v400 = vpop.f32.mrb[0].mxu0
    %v401 = vadd.f32 %v94, %v400
    %v402 = vpop.f32.mrb[0].mxu0
    %v403 = vadd.f32 %v98, %v402
    %404 = vmatprep.mubr.f32.mxu0 0.0
    %405 = vmatmul.mubr.f32.gmra.mrb[0].mxu0 %v179
    %v406 = vpop.f32.mrb[0].mxu0
    %v407 = vadd.f32 %v94, %v406
    %v408 = vpop.f32.mrb[0].mxu0
    %v409 = vadd.f32 %v98, %v408
    %410 = vmatprep.mubr.f32.mxu0 0.0
    %411 = vmatmul.mubr.f32.gmra.mrb[0].mxu0 %v182
    %v412 = vpop.f32.mrb[0].mxu0
    %v413 = vadd.f32 %v94, %v412
    %v414 = vpop.f32.mrb[0].mxu0
    %v415 = vadd.f32 %v98, %v414
    %416 = vmatprep.mubr.f32.mxu0 0.0
    %417 = vmatmul.mubr.f32.gmra.mrb[0].mxu0 %v185
    %v418 = vpop.f32.mrb[0].mxu0
    %v419 = vadd.f32 %v94, %v418
    %v420 = vpop.f32.mrb[0].mxu0
    %v421 = vadd.f32 %v98, %v420
    %422 = vmatprep.mubr.f32.mxu0 0.0
    %423 = vmatmul.mubr.f32.gmra.mrb[0].mxu0 %v188
    %v424 = vpop.f32.mrb[0].mxu0
    %v425 = vadd.f32 %v94, %v424
    %v426 = vpop.f32.mrb[0].mxu0
    %v427 = vadd.f32 %v98, %v426
    %428 = vmatprep.mubr.f32.mxu0 0.0
    %429 = vmatmul.mubr.f32.gmra.mrb[0].mxu0 %v191
    %v430 = vpop.f32.mrb[0].mxu0
    %v431 = vadd.f32 %v94, %v430
    %v432 = vpop.f32.mrb[0].mxu0
    %v433 = vadd.f32 %v98, %v432
    %434 = vmatprep.mubr.f32.mxu0 0.0
    %435 = vmatmul.mubr.f32.gmra.mrb[0].mxu0 %v194
    %v436 = vpop.f32.mrb[0].mxu0
    %v437 = vadd.f32 %v94, %v436
    %v438 = vpop.f32.mrb[0].mxu0
    %v439 = vadd.f32 %v98, %v438
    %440 = vmatprep.mubr.f32.mxu0 0.0
    %441 = vmatmul.mubr.f32.gmra.mrb[0].mxu0 %v197
    %v442 = vpop.f32.mrb[0].mxu0
    %v443 = vadd.f32 %v94, %v442
    %v444 = vpop.f32.mrb[0].mxu0
    %v445 = vadd.f32 %v98, %v444
    %446 = vmatprep.mubr.f32.mxu0 0.0
    %447 = vmatmul.mubr.f32.gmra.mrb[0].mxu0 %v200
    %v448 = vpop.f32.mrb[0].mxu0
    %v449 = vadd.f32 %v94, %v448
    %v450 = vpop.f32.mrb[0].mxu0
    %v451 = vadd.f32 %v98, %v450
    %452 = vmatprep.mubr.f32.mxu0 0.0
    %453 = vmatmul.mubr.f32.gmra.mrb[0].mxu0 %v203
    %v454 = vpop.f32.mrb[0].mxu0
    %v455 = vadd.f32 %v94, %v454
    %v456 = vpop.f32.mrb[0].mxu0
    %v457 = vadd.f32 %v98, %v456
    %458 = vmatprep.mubr.f32.mxu0 0.0
    %459 = vmatmul.mubr.f32.gmra.mrb[0].mxu0 %v206
    %v460 = vpop.f32.mrb[0].mxu0
    %v461 = vadd.f32 %v94, %v460
    %v462 = vpop.f32.mrb[0].mxu0
    %v463 = vadd.f32 %v98, %v462
    %464 = vdwg.mxu0
    %465 = vmatprep.subr.mxu0 %v76
    %466 = vmatpush1.msra.mxu0 %v75
    %467 = vmatprep.subr.mxu0 %v80
    %468 = vmatpush1.msra.mxu0 %v79
    %469 = vmatprep.subr.mxu0 %v84
    %470 = vmatpush1.msra.mxu0 %v83
    %471 = vmatprep.subr.mxu0 %v88
    %472 = vmatpush1.msra.mxu0 %v87
    %473 = vmatprep.subr.mxu0 0.0
    %474 = vmatpush1.msra.mxu0 0.0
    %475 = vmatprep.subr.mxu0 0.0
    %476 = vmatpush1.msra.mxu0 0.0
    %477 = vmatprep.subr.mxu0 0.0
    %478 = vmatpush1.msra.mxu0 0.0
    %479 = vmatprep.subr.mxu0 0.0
    %480 = vmatpush1.msra.mxu0 0.0
    %481 = vmatprep.subr.mxu0 0.0
    %482 = vmatpush1.msra.mxu0 0.0
    %483 = vmatprep.subr.mxu0 0.0
    %484 = vmatpush1.msra.mxu0 0.0
    %485 = vmatprep.subr.mxu0 0.0
    %486 = vmatpush1.msra.mxu0 0.0
    %487 = vmatprep.subr.mxu0 0.0
    %488 = vmatpush1.msra.mxu0 0.0
    %489 = vmatprep.subr.mxu0 0.0
    %490 = vmatpush1.msra.mxu0 0.0
    %491 = vmatprep.subr.mxu0 0.0
    %492 = vmatpush1.msra.mxu0 0.0
    %493 = vmatprep.subr.mxu0 0.0
    %494 = vmatpush1.msra.mxu0 0.0
    %495 = vmatprep.subr.mxu0 0.0
    %496 = vmatpush1.msra.mxu0 0.0
    %497 = vmatprep.subr.mxu0 0.0
    %498 = vmatpush1.msra.mxu0 0.0
    %499 = vmatprep.subr.mxu0 0.0
    %500 = vmatpush1.msra.mxu0 0.0
    %501 = vmatprep.subr.mxu0 0.0
    %502 = vmatpush1.msra.mxu0 0.0
    %503 = vmatprep.subr.mxu0 0.0
    %504 = vmatpush1.msra.mxu0 0.0
    %505 = vmatprep.subr.mxu0 0.0
    %506 = vmatpush1.msra.mxu0 0.0
    %507 = vmatprep.subr.mxu0 0.0
    %508 = vmatpush1.msra.mxu0 0.0
    %509 = vmatprep.subr.mxu0 0.0
    %510 = vmatpush1.msra.mxu0 0.0
    %511 = vmatprep.subr.mxu0 0.0
    %512 = vmatpush1.msra.mxu0 0.0
    %513 = vmatprep.subr.mxu0 0.0
    %514 = vmatpush1.msra.mxu0 0.0
    %515 = vmatprep.subr.mxu0 0.0
    %516 = vmatpush1.msra.mxu0 0.0
    %517 = vmatprep.subr.mxu0 0.0
    %518 = vmatpush1.msra.mxu0 0.0
    %519 = vmatprep.subr.mxu0 0.0
    %520 = vmatpush1.msra.mxu0 0.0
    %521 = vmatprep.subr.mxu0 0.0
    %522 = vmatpush1.msra.mxu0 0.0
    %523 = vmatprep.subr.mxu0 0.0
    %524 = vmatpush1.msra.mxu0 0.0
    %525 = vmatprep.subr.mxu0 0.0
    %526 = vmatpush1.msra.mxu0 0.0
    %527 = vmatprep.subr.mxu0 0.0
    %528 = vmatpush1.msra.mxu0 0.0
    %529 = vmatprep.mubr.f32.mxu0 0.0
    %530 = vmatmul.mubr.f32.gmra.mrb[0].mxu0 %v113
    %v531 = vpop.f32.mrb[0].mxu0
    %v532 = vadd.f32 %v102, %v531
    %v533 = vpop.f32.mrb[0].mxu0
    %v534 = vadd.f32 %v106, %v533
    %535 = vmatprep.mubr.f32.mxu0 0.0
    %536 = vmatmul.mubr.f32.gmra.mrb[0].mxu0 %v116
    %v537 = vpop.f32.mrb[0].mxu0
    %v538 = vadd.f32 %v102, %v537
    %v539 = vpop.f32.mrb[0].mxu0
    %v540 = vadd.f32 %v106, %v539
    %541 = vmatprep.mubr.f32.mxu0 0.0
    %542 = vmatmul.mubr.f32.gmra.mrb[0].mxu0 %v119
    %v543 = vpop.f32.mrb[0].mxu0
    %v544 = vadd.f32 %v102, %v543
    %v545 = vpop.f32.mrb[0].mxu0
    %v546 = vadd.f32 %v106, %v545
    %547 = vmatprep.mubr.f32.mxu0 0.0
    %548 = vmatmul.mubr.f32.gmra.mrb[0].mxu0 %v122
    %v549 = vpop.f32.mrb[0].mxu0
    %v550 = vadd.f32 %v102, %v549
    %v551 = vpop.f32.mrb[0].mxu0
    %v552 = vadd.f32 %v106, %v551
    %553 = vmatprep.mubr.f32.mxu0 0.0
    %554 = vmatmul.mubr.f32.gmra.mrb[0].mxu0 %v125
    %v555 = vpop.f32.mrb[0].mxu0
    %v556 = vadd.f32 %v102, %v555
    %v557 = vpop.f32.mrb[0].mxu0
    %v558 = vadd.f32 %v106, %v557
    %559 = vmatprep.mubr.f32.mxu0 0.0
    %560 = vmatmul.mubr.f32.gmra.mrb[0].mxu0 %v128
    %v561 = vpop.f32.mrb[0].mxu0
    %v562 = vadd.f32 %v102, %v561
    %v563 = vpop.f32.mrb[0].mxu0
    %v564 = vadd.f32 %v106, %v563
    %565 = vmatprep.mubr.f32.mxu0 0.0
    %566 = vmatmul.mubr.f32.gmra.mrb[0].mxu0 %v131
    %v567 = vpop.f32.mrb[0].mxu0
    %v568 = vadd.f32 %v102, %v567
    %v569 = vpop.f32.mrb[0].mxu0
    %v570 = vadd.f32 %v106, %v569
    %571 = vmatprep.mubr.f32.mxu0 0.0
    %572 = vmatmul.mubr.f32.gmra.mrb[0].mxu0 %v134
    %v573 = vpop.f32.mrb[0].mxu0
    %v574 = vadd.f32 %v102, %v573
    %v575 = vpop.f32.mrb[0].mxu0
    %v576 = vadd.f32 %v106, %v575
    %577 = vmatprep.mubr.f32.mxu0 0.0
    %578 = vmatmul.mubr.f32.gmra.mrb[0].mxu0 %v137
    %v579 = vpop.f32.mrb[0].mxu0
    %v580 = vadd.f32 %v102, %v579
    %v581 = vpop.f32.mrb[0].mxu0
    %v582 = vadd.f32 %v106, %v581
    %583 = vmatprep.mubr.f32.mxu0 0.0
    %584 = vmatmul.mubr.f32.gmra.mrb[0].mxu0 %v140
    %v585 = vpop.f32.mrb[0].mxu0
    %v586 = vadd.f32 %v102, %v585
    %v587 = vpop.f32.mrb[0].mxu0
    %v588 = vadd.f32 %v106, %v587
    %589 = vmatprep.mubr.f32.mxu0 0.0
    %590 = vmatmul.mubr.f32.gmra.mrb[0].mxu0 %v143
    %v591 = vpop.f32.mrb[0].mxu0
    %v592 = vadd.f32 %v102, %v591
    %v593 = vpop.f32.mrb[0].mxu0
    %v594 = vadd.f32 %v106, %v593
    %595 = vmatprep.mubr.f32.mxu0 0.0
    %596 = vmatmul.mubr.f32.gmra.mrb[0].mxu0 %v146
    %v597 = vpop.f32.mrb[0].mxu0
    %v598 = vadd.f32 %v102, %v597
    %v599 = vpop.f32.mrb[0].mxu0
    %v600 = vadd.f32 %v106, %v599
    %601 = vmatprep.mubr.f32.mxu0 0.0
    %602 = vmatmul.mubr.f32.gmra.mrb[0].mxu0 %v149
    %v603 = vpop.f32.mrb[0].mxu0
    %v604 = vadd.f32 %v102, %v603
    %v605 = vpop.f32.mrb[0].mxu0
    %v606 = vadd.f32 %v106, %v605
    %607 = vmatprep.mubr.f32.mxu0 0.0
    %608 = vmatmul.mubr.f32.gmra.mrb[0].mxu0 %v152
    %v609 = vpop.f32.mrb[0].mxu0
    %v610 = vadd.f32 %v102, %v609
    %v611 = vpop.f32.mrb[0].mxu0
    %v612 = vadd.f32 %v106, %v611
    %613 = vmatprep.mubr.f32.mxu0 0.0
    %614 = vmatmul.mubr.f32.gmra.mrb[0].mxu0 %v155
    %v615 = vpop.f32.mrb[0].mxu0
    %v616 = vadd.f32 %v102, %v615
    %v617 = vpop.f32.mrb[0].mxu0
    %v618 = vadd.f32 %v106, %v617
    %619 = vmatprep.mubr.f32.mxu0 0.0
    %620 = vmatmul.mubr.f32.gmra.mrb[0].mxu0 %v158
    %v621 = vpop.f32.mrb[0].mxu0
    %v622 = vadd.f32 %v102, %v621
    %v623 = vpop.f32.mrb[0].mxu0
    %v624 = vadd.f32 %v106, %v623
    %625 = vmatprep.mubr.f32.mxu0 0.0
    %626 = vmatmul.mubr.f32.gmra.mrb[0].mxu0 %v161
    %v627 = vpop.f32.mrb[0].mxu0
    %v628 = vadd.f32 %v102, %v627
    %v629 = vpop.f32.mrb[0].mxu0
    %v630 = vadd.f32 %v106, %v629
    %631 = vmatprep.mubr.f32.mxu0 0.0
    %632 = vmatmul.mubr.f32.gmra.mrb[0].mxu0 %v164
    %v633 = vpop.f32.mrb[0].mxu0
    %v634 = vadd.f32 %v102, %v633
    %v635 = vpop.f32.mrb[0].mxu0
    %v636 = vadd.f32 %v106, %v635
    %637 = vmatprep.mubr.f32.mxu0 0.0
    %638 = vmatmul.mubr.f32.gmra.mrb[0].mxu0 %v167
    %v639 = vpop.f32.mrb[0].mxu0
    %v640 = vadd.f32 %v102, %v639
    %v641 = vpop.f32.mrb[0].mxu0
    %v642 = vadd.f32 %v106, %v641
    %643 = vmatprep.mubr.f32.mxu0 0.0
    %644 = vmatmul.mubr.f32.gmra.mrb[0].mxu0 %v170
    %v645 = vpop.f32.mrb[0].mxu0
    %v646 = vadd.f32 %v102, %v645
    %v647 = vpop.f32.mrb[0].mxu0
    %v648 = vadd.f32 %v106, %v647
    %649 = vmatprep.mubr.f32.mxu0 0.0
    %650 = vmatmul.mubr.f32.gmra.mrb[0].mxu0 %v173
    %v651 = vpop.f32.mrb[0].mxu0
    %v652 = vadd.f32 %v102, %v651
    %v653 = vpop.f32.mrb[0].mxu0
    %v654 = vadd.f32 %v106, %v653
    %655 = vmatprep.mubr.f32.mxu0 0.0
    %656 = vmatmul.mubr.f32.gmra.mrb[0].mxu0 %v176
    %v657 = vpop.f32.mrb[0].mxu0
    %v658 = vadd.f32 %v102, %v657
    %v659 = vpop.f32.mrb[0].mxu0
    %v660 = vadd.f32 %v106, %v659
    %661 = vmatprep.mubr.f32.mxu0 0.0
    %662 = vmatmul.mubr.f32.gmra.mrb[0].mxu0 %v179
    %v663 = vpop.f32.mrb[0].mxu0
    %v664 = vadd.f32 %v102, %v663
    %v665 = vpop.f32.mrb[0].mxu0
    %v666 = vadd.f32 %v106, %v665
    %667 = vmatprep.mubr.f32.mxu0 0.0
    %668 = vmatmul.mubr.f32.gmra.mrb[0].mxu0 %v182
    %v669 = vpop.f32.mrb[0].mxu0
    %v670 = vadd.f32 %v102, %v669
    %v671 = vpop.f32.mrb[0].mxu0
    %v672 = vadd.f32 %v106, %v671
    %673 = vmatprep.mubr.f32.mxu0 0.0
    %674 = vmatmul.mubr.f32.gmra.mrb[0].mxu0 %v185
    %v675 = vpop.f32.mrb[0].mxu0
    %v676 = vadd.f32 %v102, %v675
    %v677 = vpop.f32.mrb[0].mxu0
    %v678 = vadd.f32 %v106, %v677
    %679 = vmatprep.mubr.f32.mxu0 0.0
    %680 = vmatmul.mubr.f32.gmra.mrb[0].mxu0 %v188
    %v681 = vpop.f32.mrb[0].mxu0
    %v682 = vadd.f32 %v102, %v681
    %v683 = vpop.f32.mrb[0].mxu0
    %v684 = vadd.f32 %v106, %v683
    %685 = vmatprep.mubr.f32.mxu0 0.0
    %686 = vmatmul.mubr.f32.gmra.mrb[0].mxu0 %v191
    %v687 = vpop.f32.mrb[0].mxu0
    %v688 = vadd.f32 %v102, %v687
    %v689 = vpop.f32.mrb[0].mxu0
    %v690 = vadd.f32 %v106, %v689
    %691 = vmatprep.mubr.f32.mxu0 0.0
    %692 = vmatmul.mubr.f32.gmra.mrb[0].mxu0 %v194
    %v693 = vpop.f32.mrb[0].mxu0
    %v694 = vadd.f32 %v102, %v693
    %v695 = vpop.f32.mrb[0].mxu0
    %v696 = vadd.f32 %v106, %v695
    %697 = vmatprep.mubr.f32.mxu0 0.0
    %698 = vmatmul.mubr.f32.gmra.mrb[0].mxu0 %v197
    %v699 = vpop.f32.mrb[0].mxu0
    %v700 = vadd.f32 %v102, %v699
    %v701 = vpop.f32.mrb[0].mxu0
    %v702 = vadd.f32 %v106, %v701
    %703 = vmatprep.mubr.f32.mxu0 0.0
    %704 = vmatmul.mubr.f32.gmra.mrb[0].mxu0 %v200
    %v705 = vpop.f32.mrb[0].mxu0
    %v706 = vadd.f32 %v102, %v705
    %v707 = vpop.f32.mrb[0].mxu0
    %v708 = vadd.f32 %v106, %v707
    %709 = vmatprep.mubr.f32.mxu0 0.0
    %710 = vmatmul.mubr.f32.gmra.mrb[0].mxu0 %v203
    %v711 = vpop.f32.mrb[0].mxu0
    %v712 = vadd.f32 %v102, %v711
    %v713 = vpop.f32.mrb[0].mxu0
    %v714 = vadd.f32 %v106, %v713
    %715 = vmatprep.mubr.f32.mxu0 0.0
    %716 = vmatmul.mubr.f32.gmra.mrb[0].mxu0 %v206
    %v717 = vpop.f32.mrb[0].mxu0
    %v718 = vadd.f32 %v102, %v717
    %v719 = vpop.f32.mrb[0].mxu0
    %v720 = vadd.f32 %v106, %v719
    %721 = vdwg.mxu0
    %v722 = vmax.f32 %v275, 0.0
    %v723 = vmax.f32 %v277, 0.0
    %v724 = vmax.f32 %v532, 0.0
    %v725 = vmax.f32 %v534, 0.0
    %v726 = vmax.f32 %v281, 0.0
    %v727 = vmax.f32 %v283, 0.0
    %v728 = vmax.f32 %v538, 0.0
    %v729 = vmax.f32 %v540, 0.0
    %v730 = vmax.f32 %v287, 0.0
    %v731 = vmax.f32 %v289, 0.0
    %v732 = vmax.f32 %v544, 0.0
    %v733 = vmax.f32 %v546, 0.0
    %v734 = vmax.f32 %v293, 0.0
    %v735 = vmax.f32 %v295, 0.0
    %v736 = vmax.f32 %v550, 0.0
    %v737 = vmax.f32 %v552, 0.0
    %v738 = vmax.f32 %v299, 0.0
    %v739 = vmax.f32 %v301, 0.0
    %v740 = vmax.f32 %v556, 0.0
    %v741 = vmax.f32 %v558, 0.0
    %v742 = vmax.f32 %v305, 0.0
    %v743 = vmax.f32 %v307, 0.0
    %v744 = vmax.f32 %v562, 0.0
    %v745 = vmax.f32 %v564, 0.0
    %v746 = vmax.f32 %v311, 0.0
    %v747 = vmax.f32 %v313, 0.0
    %v748 = vmax.f32 %v568, 0.0
    %v749 = vmax.f32 %v570, 0.0
    %v750 = vmax.f32 %v317, 0.0
    %v751 = vmax.f32 %v319, 0.0
    %v752 = vmax.f32 %v574, 0.0
    %v753 = vmax.f32 %v576, 0.0
    %v754 = vmax.f32 %v323, 0.0
    %v755 = vmax.f32 %v325, 0.0
    %v756 = vmax.f32 %v580, 0.0
    %v757 = vmax.f32 %v582, 0.0
    %v758 = vmax.f32 %v329, 0.0
    %v759 = vmax.f32 %v331, 0.0
    %v760 = vmax.f32 %v586, 0.0
    %v761 = vmax.f32 %v588, 0.0
    %v762 = vmax.f32 %v335, 0.0
    %v763 = vmax.f32 %v337, 0.0
    %v764 = vmax.f32 %v592, 0.0
    %v765 = vmax.f32 %v594, 0.0
    %v766 = vmax.f32 %v341, 0.0
    %v767 = vmax.f32 %v343, 0.0
    %v768 = vmax.f32 %v598, 0.0
    %v769 = vmax.f32 %v600, 0.0
    %v770 = vmax.f32 %v347, 0.0
    %v771 = vmax.f32 %v349, 0.0
    %v772 = vmax.f32 %v604, 0.0
    %v773 = vmax.f32 %v606, 0.0
    %v774 = vmax.f32 %v353, 0.0
    %v775 = vmax.f32 %v355, 0.0
    %v776 = vmax.f32 %v610, 0.0
    %v777 = vmax.f32 %v612, 0.0
    %v778 = vmax.f32 %v359, 0.0
    %v779 = vmax.f32 %v361, 0.0
    %v780 = vmax.f32 %v616, 0.0
    %v781 = vmax.f32 %v618, 0.0
    %v782 = vmax.f32 %v365, 0.0
    %v783 = vmax.f32 %v367, 0.0
    %v784 = vmax.f32 %v622, 0.0
    %v785 = vmax.f32 %v624, 0.0
    %v786 = vmax.f32 %v371, 0.0
    %v787 = vmax.f32 %v373, 0.0
    %v788 = vmax.f32 %v628, 0.0
    %v789 = vmax.f32 %v630, 0.0
    %v790 = vmax.f32 %v377, 0.0
    %v791 = vmax.f32 %v379, 0.0
    %v792 = vmax.f32 %v634, 0.0
    %v793 = vmax.f32 %v636, 0.0
    %v794 = vmax.f32 %v383, 0.0
    %v795 = vmax.f32 %v385, 0.0
    %v796 = vmax.f32 %v640, 0.0
    %v797 = vmax.f32 %v642, 0.0
    %v798 = vmax.f32 %v389, 0.0
    %v799 = vmax.f32 %v391, 0.0
    %v800 = vmax.f32 %v646, 0.0
    %v801 = vmax.f32 %v648, 0.0
    %v802 = vmax.f32 %v395, 0.0
    %v803 = vmax.f32 %v397, 0.0
    %v804 = vmax.f32 %v652, 0.0
    %v805 = vmax.f32 %v654, 0.0
    %v806 = vmax.f32 %v401, 0.0
    %v807 = vmax.f32 %v403, 0.0
    %v808 = vmax.f32 %v658, 0.0
    %v809 = vmax.f32 %v660, 0.0
    %v810 = vmax.f32 %v407, 0.0
    %v811 = vmax.f32 %v409, 0.0
    %v812 = vmax.f32 %v664, 0.0
    %v813 = vmax.f32 %v666, 0.0
    %v814 = vmax.f32 %v413, 0.0
    %v815 = vmax.f32 %v415, 0.0
    %v816 = vmax.f32 %v670, 0.0
    %v817 = vmax.f32 %v672, 0.0
    %v818 = vmax.f32 %v419, 0.0
    %v819 = vmax.f32 %v421, 0.0
    %v820 = vmax.f32 %v676, 0.0
    %v821 = vmax.f32 %v678, 0.0
    %v822 = vmax.f32 %v425, 0.0
    %v823 = vmax.f32 %v427, 0.0
    %v824 = vmax.f32 %v682, 0.0
    %v825 = vmax.f32 %v684, 0.0
    %v826 = vmax.f32 %v431, 0.0
    %v827 = vmax.f32 %v433, 0.0
    %v828 = vmax.f32 %v688, 0.0
    %v829 = vmax.f32 %v690, 0.0
    %v830 = vmax.f32 %v437, 0.0
    %v831 = vmax.f32 %v439, 0.0
    %v832 = vmax.f32 %v694, 0.0
    %v833 = vmax.f32 %v696, 0.0
    %v834 = vmax.f32 %v443, 0.0
    %v835 = vmax.f32 %v445, 0.0
    %v836 = vmax.f32 %v700, 0.0
    %v837 = vmax.f32 %v702, 0.0
    %v838 = vmax.f32 %v449, 0.0
    %v839 = vmax.f32 %v451, 0.0
    %v840 = vmax.f32 %v706, 0.0
    %v841 = vmax.f32 %v708, 0.0
    %v842 = vmax.f32 %v455, 0.0
    %v843 = vmax.f32 %v457, 0.0
    %v844 = vmax.f32 %v712, 0.0
    %v845 = vmax.f32 %v714, 0.0
    %v846 = vmax.f32 %v461, 0.0
    %v847 = vmax.f32 %v463, 0.0
    %v848 = vmax.f32 %v718, 0.0
    %v849 = vmax.f32 %v720, 0.0
    %v850 = vld [vmem:[#allocation3] sm:$0xff]
    %v851 = vld [vmem:[#allocation3 + $0x8] sm:$0xff]
    %v852 = vld [vmem:[#allocation3 + $0x10] sm:$0xff]
    %v853 = vld [vmem:[#allocation3 + $0x18] sm:$0xff]
    %v854 = vld [vmem:[#allocation3 + $0x20] sm:$0xff]
    %v855 = vld [vmem:[#allocation3 + $0x28] sm:$0xff]
    %v856 = vld [vmem:[#allocation3 + $0x30] sm:$0xff]
    %v857 = vld [vmem:[#allocation3 + $0x38] sm:$0xff]
    %v858 = vld [vmem:[#allocation3 + $0x40] sm:$0xff]
    %v859 = vld [vmem:[#allocation3 + $0x48] sm:$0xff]
    %v860 = vld [vmem:[#allocation3 + $0x50] sm:$0xff]
    %v861 = vld [vmem:[#allocation3 + $0x58] sm:$0xff]
    %v862 = vld [vmem:[#allocation3 + $0x60] sm:$0xff]
    %v863 = vld [vmem:[#allocation3 + $0x68] sm:$0xff]
    %v864 = vld [vmem:[#allocation3 + $0x70] sm:$0xff]
    %v865 = vld [vmem:[#allocation3 + $0x78] sm:$0xff]
    %v866 = vld [vmem:[#allocation3 + $0x80] sm:$0xff]
    %v867 = vld [vmem:[#allocation3 + $0x88] sm:$0xff]
    %v868 = vld [vmem:[#allocation3 + $0x90] sm:$0xff]
    %v869 = vld [vmem:[#allocation3 + $0x98] sm:$0xff]
    %v870 = vld [vmem:[#allocation3 + $0xa0] sm:$0xff]
    %v871 = vld [vmem:[#allocation3 + $0xa8] sm:$0xff]
    %v872 = vld [vmem:[#allocation3 + $0xb0] sm:$0xff]
    %v873 = vld [vmem:[#allocation3 + $0xb8] sm:$0xff]
    %v874 = vld [vmem:[#allocation3 + $0xc0] sm:$0xff]
    %v875 = vld [vmem:[#allocation3 + $0xc8] sm:$0xff]
    %v876 = vld [vmem:[#allocation3 + $0xd0] sm:$0xff]
    %v877 = vld [vmem:[#allocation3 + $0xd8] sm:$0xff]
    %v878 = vld [vmem:[#allocation3 + $0xe0] sm:$0xff]
    %v879 = vld [vmem:[#allocation3 + $0xe8] sm:$0xff]
    %v880 = vld [vmem:[#allocation3 + $0xf0] sm:$0xff]
    %v881 = vld [vmem:[#allocation3 + $0xf8] sm:$0xff]
    %v882 = vld [vmem:[#allocation3 + $0x100] sm:$0xff]
    %v883 = vld [vmem:[#allocation3 + $0x108] sm:$0xff]
    %v884 = vld [vmem:[#allocation3 + $0x110] sm:$0xff]
    %v885 = vld [vmem:[#allocation3 + $0x118] sm:$0xff]
    %v886 = vld [vmem:[#allocation3 + $0x120] sm:$0xff]
    %v887 = vld [vmem:[#allocation3 + $0x128] sm:$0xff]
    %v888 = vld [vmem:[#allocation3 + $0x130] sm:$0xff]
    %v889 = vld [vmem:[#allocation3 + $0x138] sm:$0xff]
    %v890 = vld [vmem:[#allocation3 + $0x140] sm:$0xff]
    %v891 = vld [vmem:[#allocation3 + $0x148] sm:$0xff]
    %v892 = vld [vmem:[#allocation3 + $0x150] sm:$0xff]
    %v893 = vld [vmem:[#allocation3 + $0x158] sm:$0xff]
    %v894 = vld [vmem:[#allocation3 + $0x160] sm:$0xff]
    %v895 = vld [vmem:[#allocation3 + $0x168] sm:$0xff]
    %v896 = vld [vmem:[#allocation3 + $0x170] sm:$0xff]
    %v897 = vld [vmem:[#allocation3 + $0x178] sm:$0xff]
    %v898 = vld [vmem:[#allocation3 + $0x180] sm:$0xff]
    %v899 = vld [vmem:[#allocation3 + $0x188] sm:$0xff]
    %v900 = vld [vmem:[#allocation3 + $0x190] sm:$0xff]
    %v901 = vld [vmem:[#allocation3 + $0x198] sm:$0xff]
    %v902 = vld [vmem:[#allocation3 + $0x1a0] sm:$0xff]
    %v903 = vld [vmem:[#allocation3 + $0x1a8] sm:$0xff]
    %v904 = vld [vmem:[#allocation3 + $0x1b0] sm:$0xff]
    %v905 = vld [vmem:[#allocation3 + $0x1b8] sm:$0xff]
    %v906 = vld [vmem:[#allocation3 + $0x1c0] sm:$0xff]
    %v907 = vld [vmem:[#allocation3 + $0x1c8] sm:$0xff]
    %v908 = vld [vmem:[#allocation3 + $0x1d0] sm:$0xff]
    %v909 = vld [vmem:[#allocation3 + $0x1d8] sm:$0xff]
    %v910 = vld [vmem:[#allocation3 + $0x1e0] sm:$0xff]
    %v911 = vld [vmem:[#allocation3 + $0x1e8] sm:$0xff]
    %v912 = vld [vmem:[#allocation3 + $0x1f0] sm:$0xff]
    %v913 = vld [vmem:[#allocation3 + $0x1f8] sm:$0xff]
    %v914 = vld [vmem:[#allocation3 + $0x200] sm:$0xff]
    %v915 = vld [vmem:[#allocation3 + $0x208] sm:$0xff]
    %v916 = vld [vmem:[#allocation3 + $0x210] sm:$0xff]
    %v917 = vld [vmem:[#allocation3 + $0x218] sm:$0xff]
    %v918 = vld [vmem:[#allocation3 + $0x220] sm:$0xff]
    %v919 = vld [vmem:[#allocation3 + $0x228] sm:$0xff]
    %v920 = vld [vmem:[#allocation3 + $0x230] sm:$0xff]
    %v921 = vld [vmem:[#allocation3 + $0x238] sm:$0xff]
    %v922 = vld [vmem:[#allocation3 + $0x240] sm:$0xff]
    %v923 = vld [vmem:[#allocation3 + $0x248] sm:$0xff]
    %v924 = vld [vmem:[#allocation3 + $0x250] sm:$0xff]
    %v925 = vld [vmem:[#allocation3 + $0x258] sm:$0xff]
    %v926 = vld [vmem:[#allocation3 + $0x260] sm:$0xff]
    %v927 = vld [vmem:[#allocation3 + $0x268] sm:$0xff]
    %v928 = vld [vmem:[#allocation3 + $0x270] sm:$0xff]
    %v929 = vld [vmem:[#allocation3 + $0x278] sm:$0xff]
    %v930 = vld [vmem:[#allocation3 + $0x280] sm:$0xff]
    %v931 = vld [vmem:[#allocation3 + $0x288] sm:$0xff]
    %v932 = vld [vmem:[#allocation3 + $0x290] sm:$0xff]
    %v933 = vld [vmem:[#allocation3 + $0x298] sm:$0xff]
    %v934 = vld [vmem:[#allocation3 + $0x2a0] sm:$0xff]
    %v935 = vld [vmem:[#allocation3 + $0x2a8] sm:$0xff]
    %v936 = vld [vmem:[#allocation3 + $0x2b0] sm:$0xff]
    %v937 = vld [vmem:[#allocation3 + $0x2b8] sm:$0xff]
    %v938 = vld [vmem:[#allocation3 + $0x2c0] sm:$0xff]
    %v939 = vld [vmem:[#allocation3 + $0x2c8] sm:$0xff]
    %v940 = vld [vmem:[#allocation3 + $0x2d0] sm:$0xff]
    %v941 = vld [vmem:[#allocation3 + $0x2d8] sm:$0xff]
    %v942 = vld [vmem:[#allocation3 + $0x2e0] sm:$0xff]
    %v943 = vld [vmem:[#allocation3 + $0x2e8] sm:$0xff]
    %v944 = vld [vmem:[#allocation3 + $0x2f0] sm:$0xff]
    %v945 = vld [vmem:[#allocation3 + $0x2f8] sm:$0xff]
    %v946 = vld [vmem:[#allocation3 + $0x300] sm:$0xff]
    %v947 = vld [vmem:[#allocation3 + $0x308] sm:$0xff]
    %v948 = vld [vmem:[#allocation3 + $0x310] sm:$0xff]
    %v949 = vld [vmem:[#allocation3 + $0x318] sm:$0xff]
    %v950 = vld [vmem:[#allocation3 + $0x320] sm:$0xff]
    %v951 = vld [vmem:[#allocation3 + $0x328] sm:$0xff]
    %v952 = vld [vmem:[#allocation3 + $0x330] sm:$0xff]
    %v953 = vld [vmem:[#allocation3 + $0x338] sm:$0xff]
    %v954 = vld [vmem:[#allocation3 + $0x340] sm:$0xff]
    %v955 = vld [vmem:[#allocation3 + $0x348] sm:$0xff]
    %v956 = vld [vmem:[#allocation3 + $0x350] sm:$0xff]
    %v957 = vld [vmem:[#allocation3 + $0x358] sm:$0xff]
    %v958 = vld [vmem:[#allocation3 + $0x360] sm:$0xff]
    %v959 = vld [vmem:[#allocation3 + $0x368] sm:$0xff]
    %v960 = vld [vmem:[#allocation3 + $0x370] sm:$0xff]
    %v961 = vld [vmem:[#allocation3 + $0x378] sm:$0xff]
    %v962 = vld [vmem:[#allocation3 + $0x380] sm:$0xff]
    %v963 = vld [vmem:[#allocation3 + $0x388] sm:$0xff]
    %v964 = vld [vmem:[#allocation3 + $0x390] sm:$0xff]
    %v965 = vld [vmem:[#allocation3 + $0x398] sm:$0xff]
    %v966 = vld [vmem:[#allocation3 + $0x3a0] sm:$0xff]
    %v967 = vld [vmem:[#allocation3 + $0x3a8] sm:$0xff]
    %v968 = vld [vmem:[#allocation3 + $0x3b0] sm:$0xff]
    %v969 = vld [vmem:[#allocation3 + $0x3b8] sm:$0xff]
    %v970 = vld [vmem:[#allocation3 + $0x3c0] sm:$0xff]
    %v971 = vld [vmem:[#allocation3 + $0x3c8] sm:$0xff]
    %v972 = vld [vmem:[#allocation3 + $0x3d0] sm:$0xff]
    %v973 = vld [vmem:[#allocation3 + $0x3d8] sm:$0xff]
    %v974 = vld [vmem:[#allocation3 + $0x3e0] sm:$0xff]
    %v975 = vld [vmem:[#allocation3 + $0x3e8] sm:$0xff]
    %v976 = vld [vmem:[#allocation3 + $0x3f0] sm:$0xff]
    %v977 = vld [vmem:[#allocation3 + $0x3f8] sm:$0xff]
    %v978 = vld [vmem:[#allocation3 + $0x400] sm:$0xff]
    %v979 = vld [vmem:[#allocation3 + $0x408] sm:$0xff]
    %v980 = vld [vmem:[#allocation3 + $0x410] sm:$0xff]
    %v981 = vld [vmem:[#allocation3 + $0x418] sm:$0xff]
    %v982 = vld [vmem:[#allocation3 + $0x420] sm:$0xff]
    %v983 = vld [vmem:[#allocation3 + $0x428] sm:$0xff]
    %v984 = vld [vmem:[#allocation3 + $0x430] sm:$0xff]
    %v985 = vld [vmem:[#allocation3 + $0x438] sm:$0xff]
    %v986 = vld [vmem:[#allocation3 + $0x440] sm:$0xff]
    %v987 = vld [vmem:[#allocation3 + $0x448] sm:$0xff]
    %v988 = vld [vmem:[#allocation3 + $0x450] sm:$0xff]
    %v989 = vld [vmem:[#allocation3 + $0x458] sm:$0xff]
    %v990 = vld [vmem:[#allocation3 + $0x460] sm:$0xff]
    %v991 = vld [vmem:[#allocation3 + $0x468] sm:$0xff]
    %v992 = vld [vmem:[#allocation3 + $0x470] sm:$0xff]
    %v993 = vld [vmem:[#allocation3 + $0x478] sm:$0xff]
    %v994 = vld [vmem:[#allocation3 + $0x480] sm:$0xff]
    %v995 = vld [vmem:[#allocation3 + $0x488] sm:$0xff]
    %v996 = vld [vmem:[#allocation3 + $0x490] sm:$0xff]
    %v997 = vld [vmem:[#allocation3 + $0x498] sm:$0xff]
    %v998 = vld [vmem:[#allocation3 + $0x4a0] sm:$0xff]
    %v999 = vld [vmem:[#allocation3 + $0x4a8] sm:$0xff]
    %v1000 = vld [vmem:[#allocation3 + $0x4b0] sm:$0xff]
    %v1001 = vld [vmem:[#allocation3 + $0x4b8] sm:$0xff]
    %v1002 = vld [vmem:[#allocation3 + $0x4c0] sm:$0xff]
    %v1003 = vld [vmem:[#allocation3 + $0x4c8] sm:$0xff]
    %v1004 = vld [vmem:[#allocation3 + $0x4d0] sm:$0xff]
    %v1005 = vld [vmem:[#allocation3 + $0x4d8] sm:$0xff]
    %v1006 = vld [vmem:[#allocation3 + $0x4e0] sm:$0xff]
    %v1007 = vld [vmem:[#allocation3 + $0x4e8] sm:$0xff]
    %v1008 = vld [vmem:[#allocation3 + $0x4f0] sm:$0xff]
    %v1009 = vld [vmem:[#allocation3 + $0x4f8] sm:$0xff]
    %v1010 = vld [vmem:[#allocation3 + $0x500] sm:$0xff]
    %v1011 = vld [vmem:[#allocation3 + $0x508] sm:$0xff]
    %v1012 = vld [vmem:[#allocation3 + $0x510] sm:$0xff]
    %v1013 = vld [vmem:[#allocation3 + $0x518] sm:$0xff]
    %v1014 = vld [vmem:[#allocation3 + $0x520] sm:$0xff]
    %v1015 = vld [vmem:[#allocation3 + $0x528] sm:$0xff]
    %v1016 = vld [vmem:[#allocation3 + $0x530] sm:$0xff]
    %v1017 = vld [vmem:[#allocation3 + $0x538] sm:$0xff]
    %v1018 = vld [vmem:[#allocation3 + $0x540] sm:$0xff]
    %v1019 = vld [vmem:[#allocation3 + $0x548] sm:$0xff]
    %v1020 = vld [vmem:[#allocation3 + $0x550] sm:$0xff]
    %v1021 = vld [vmem:[#allocation3 + $0x558] sm:$0xff]
    %v1022 = vld [vmem:[#allocation3 + $0x560] sm:$0xff]
    %v1023 = vld [vmem:[#allocation3 + $0x568] sm:$0xff]
    %v1024 = vld [vmem:[#allocation3 + $0x570] sm:$0xff]
    %v1025 = vld [vmem:[#allocation3 + $0x578] sm:$0xff]
    %v1026 = vld [vmem:[#allocation3 + $0x580] sm:$0xff]
    %v1027 = vld [vmem:[#allocation3 + $0x588] sm:$0xff]
    %v1028 = vld [vmem:[#allocation3 + $0x590] sm:$0xff]
    %v1029 = vld [vmem:[#allocation3 + $0x598] sm:$0xff]
    %v1030 = vld [vmem:[#allocation3 + $0x5a0] sm:$0xff]
    %v1031 = vld [vmem:[#allocation3 + $0x5a8] sm:$0xff]
    %v1032 = vld [vmem:[#allocation3 + $0x5b0] sm:$0xff]
    %v1033 = vld [vmem:[#allocation3 + $0x5b8] sm:$0xff]
    %v1034 = vld [vmem:[#allocation3 + $0x5c0] sm:$0xff]
    %v1035 = vld [vmem:[#allocation3 + $0x5c8] sm:$0xff]
    %v1036 = vld [vmem:[#allocation3 + $0x5d0] sm:$0xff]
    %v1037 = vld [vmem:[#allocation3 + $0x5d8] sm:$0xff]
    %v1038 = vld [vmem:[#allocation3 + $0x5e0] sm:$0xff]
    %v1039 = vld [vmem:[#allocation3 + $0x5e8] sm:$0xff]
    %v1040 = vld [vmem:[#allocation3 + $0x5f0] sm:$0xff]
    %v1041 = vld [vmem:[#allocation3 + $0x5f8] sm:$0xff]
    %v1042 = vld [vmem:[#allocation3 + $0x600] sm:$0xff]
    %v1043 = vld [vmem:[#allocation3 + $0x608] sm:$0xff]
    %v1044 = vld [vmem:[#allocation3 + $0x610] sm:$0xff]
    %v1045 = vld [vmem:[#allocation3 + $0x618] sm:$0xff]
    %v1046 = vld [vmem:[#allocation3 + $0x620] sm:$0xff]
    %v1047 = vld [vmem:[#allocation3 + $0x628] sm:$0xff]
    %v1048 = vld [vmem:[#allocation3 + $0x630] sm:$0xff]
    %v1049 = vld [vmem:[#allocation3 + $0x638] sm:$0xff]
    %v1050 = vld [vmem:[#allocation3 + $0x640] sm:$0xff]
    %v1051 = vld [vmem:[#allocation3 + $0x648] sm:$0xff]
    %v1052 = vld [vmem:[#allocation3 + $0x650] sm:$0xff]
    %v1053 = vld [vmem:[#allocation3 + $0x658] sm:$0xff]
    %v1054 = vld [vmem:[#allocation3 + $0x660] sm:$0xff]
    %v1055 = vld [vmem:[#allocation3 + $0x668] sm:$0xff]
    %v1056 = vld [vmem:[#allocation3 + $0x670] sm:$0xff]
    %v1057 = vld [vmem:[#allocation3 + $0x678] sm:$0xff]
    %v1058 = vld [vmem:[#allocation3 + $0x680] sm:$0xff]
    %v1059 = vld [vmem:[#allocation3 + $0x688] sm:$0xff]
    %v1060 = vld [vmem:[#allocation3 + $0x690] sm:$0xff]
    %v1061 = vld [vmem:[#allocation3 + $0x698] sm:$0xff]
    %v1062 = vld [vmem:[#allocation3 + $0x6a0] sm:$0xff]
    %v1063 = vld [vmem:[#allocation3 + $0x6a8] sm:$0xff]
    %v1064 = vld [vmem:[#allocation3 + $0x6b0] sm:$0xff]
    %v1065 = vld [vmem:[#allocation3 + $0x6b8] sm:$0xff]
    %v1066 = vld [vmem:[#allocation3 + $0x6c0] sm:$0xff]
    %v1067 = vld [vmem:[#allocation3 + $0x6c8] sm:$0xff]
    %v1068 = vld [vmem:[#allocation3 + $0x6d0] sm:$0xff]
    %v1069 = vld [vmem:[#allocation3 + $0x6d8] sm:$0xff]
    %v1070 = vld [vmem:[#allocation3 + $0x6e0] sm:$0xff]
    %v1071 = vld [vmem:[#allocation3 + $0x6e8] sm:$0xff]
    %v1072 = vld [vmem:[#allocation3 + $0x6f0] sm:$0xff]
    %v1073 = vld [vmem:[#allocation3 + $0x6f8] sm:$0xff]
    %v1074 = vld [vmem:[#allocation3 + $0x700] sm:$0xff]
    %v1075 = vld [vmem:[#allocation3 + $0x708] sm:$0xff]
    %v1076 = vld [vmem:[#allocation3 + $0x710] sm:$0xff]
    %v1077 = vld [vmem:[#allocation3 + $0x718] sm:$0xff]
    %v1078 = vld [vmem:[#allocation3 + $0x720] sm:$0xff]
    %v1079 = vld [vmem:[#allocation3 + $0x728] sm:$0xff]
    %v1080 = vld [vmem:[#allocation3 + $0x730] sm:$0xff]
    %v1081 = vld [vmem:[#allocation3 + $0x738] sm:$0xff]
    %v1082 = vld [vmem:[#allocation3 + $0x740] sm:$0xff]
    %v1083 = vld [vmem:[#allocation3 + $0x748] sm:$0xff]
    %v1084 = vld [vmem:[#allocation3 + $0x750] sm:$0xff]
    %v1085 = vld [vmem:[#allocation3 + $0x758] sm:$0xff]
    %v1086 = vld [vmem:[#allocation3 + $0x760] sm:$0xff]
    %v1087 = vld [vmem:[#allocation3 + $0x768] sm:$0xff]
    %v1088 = vld [vmem:[#allocation3 + $0x770] sm:$0xff]
    %v1089 = vld [vmem:[#allocation3 + $0x778] sm:$0xff]
    %v1090 = vld [vmem:[#allocation3 + $0x780] sm:$0xff]
    %v1091 = vld [vmem:[#allocation3 + $0x788] sm:$0xff]
    %v1092 = vld [vmem:[#allocation3 + $0x790] sm:$0xff]
    %v1093 = vld [vmem:[#allocation3 + $0x798] sm:$0xff]
    %v1094 = vld [vmem:[#allocation3 + $0x7a0] sm:$0xff]
    %v1095 = vld [vmem:[#allocation3 + $0x7a8] sm:$0xff]
    %v1096 = vld [vmem:[#allocation3 + $0x7b0] sm:$0xff]
    %v1097 = vld [vmem:[#allocation3 + $0x7b8] sm:$0xff]
    %v1098 = vld [vmem:[#allocation3 + $0x7c0] sm:$0xff]
    %v1099 = vld [vmem:[#allocation3 + $0x7c8] sm:$0xff]
    %v1100 = vld [vmem:[#allocation3 + $0x7d0] sm:$0xff]
    %v1101 = vld [vmem:[#allocation3 + $0x7d8] sm:$0xff]
    %v1102 = vld [vmem:[#allocation3 + $0x7e0] sm:$0xff]
    %v1103 = vld [vmem:[#allocation3 + $0x7e8] sm:$0xff]
    %v1104 = vld [vmem:[#allocation3 + $0x7f0] sm:$0xff]
    %v1105 = vld [vmem:[#allocation3 + $0x7f8] sm:$0xff]
    %v1106 = vld [vmem:[%s4] sm:$0xf]
    %v1108 = vlaneseq
    %v1109 = vshrl.u32 %v1108, 7
    %v1110 = vsub.s32 0, %v1109
    %v1111 = vrot.slane %v1106, %v1110
    %v1112 = vlaneseq
    %v1113 = vshrl.u32 %v1112, 7
    %v1114 = vsub.s32 1, %v1113
    %v1115 = vrot.slane %v1106, %v1114
    %v1116 = vlaneseq
    %v1117 = vshrl.u32 %v1116, 7
    %v1118 = vsub.s32 2, %v1117
    %v1119 = vrot.slane %v1106, %v1118
    %v1120 = vlaneseq
    %v1121 = vshrl.u32 %v1120, 7
    %v1122 = vsub.s32 3, %v1121
    %v1123 = vrot.slane %v1106, %v1122
    %1128 = vmatprep.subr.mxu0 %v851
    %1129 = vmatpush1.msra.mxu0 %v850
    %1130 = vmatprep.subr.mxu0 %v855
    %1131 = vmatpush1.msra.mxu0 %v854
    %1132 = vmatprep.subr.mxu0 %v859
    %1133 = vmatpush1.msra.mxu0 %v858
    %1134 = vmatprep.subr.mxu0 %v863
    %1135 = vmatpush1.msra.mxu0 %v862
    %1136 = vmatprep.subr.mxu0 %v867
    %1137 = vmatpush1.msra.mxu0 %v866
    %1138 = vmatprep.subr.mxu0 %v871
    %1139 = vmatpush1.msra.mxu0 %v870
    %1140 = vmatprep.subr.mxu0 %v875
    %1141 = vmatpush1.msra.mxu0 %v874
    %1142 = vmatprep.subr.mxu0 %v879
    %1143 = vmatpush1.msra.mxu0 %v878
    %1144 = vmatprep.subr.mxu0 %v883
    %1145 = vmatpush1.msra.mxu0 %v882
    %1146 = vmatprep.subr.mxu0 %v887
    %1147 = vmatpush1.msra.mxu0 %v886
    %1148 = vmatprep.subr.mxu0 %v891
    %1149 = vmatpush1.msra.mxu0 %v890
    %1150 = vmatprep.subr.mxu0 %v895
    %1151 = vmatpush1.msra.mxu0 %v894
    %1152 = vmatprep.subr.mxu0 %v899
    %1153 = vmatpush1.msra.mxu0 %v898
    %1154 = vmatprep.subr.mxu0 %v903
    %1155 = vmatpush1.msra.mxu0 %v902
    %1156 = vmatprep.subr.mxu0 %v907
    %1157 = vmatpush1.msra.mxu0 %v906
    %1158 = vmatprep.subr.mxu0 %v911
    %1159 = vmatpush1.msra.mxu0 %v910
    %1160 = vmatprep.subr.mxu0 %v915
    %1161 = vmatpush1.msra.mxu0 %v914
    %1162 = vmatprep.subr.mxu0 %v919
    %1163 = vmatpush1.msra.mxu0 %v918
    %1164 = vmatprep.subr.mxu0 %v923
    %1165 = vmatpush1.msra.mxu0 %v922
    %1166 = vmatprep.subr.mxu0 %v927
    %1167 = vmatpush1.msra.mxu0 %v926
    %1168 = vmatprep.subr.mxu0 %v931
    %1169 = vmatpush1.msra.mxu0 %v930
    %1170 = vmatprep.subr.mxu0 %v935
    %1171 = vmatpush1.msra.mxu0 %v934
    %1172 = vmatprep.subr.mxu0 %v939
    %1173 = vmatpush1.msra.mxu0 %v938
    %1174 = vmatprep.subr.mxu0 %v943
    %1175 = vmatpush1.msra.mxu0 %v942
    %1176 = vmatprep.subr.mxu0 %v947
    %1177 = vmatpush1.msra.mxu0 %v946
    %1178 = vmatprep.subr.mxu0 %v951
    %1179 = vmatpush1.msra.mxu0 %v950
    %1180 = vmatprep.subr.mxu0 %v955
    %1181 = vmatpush1.msra.mxu0 %v954
    %1182 = vmatprep.subr.mxu0 %v959
    %1183 = vmatpush1.msra.mxu0 %v958
    %1184 = vmatprep.subr.mxu0 %v963
    %1185 = vmatpush1.msra.mxu0 %v962
    %1186 = vmatprep.subr.mxu0 %v967
    %1187 = vmatpush1.msra.mxu0 %v966
    %1188 = vmatprep.subr.mxu0 %v971
    %1189 = vmatpush1.msra.mxu0 %v970
    %1190 = vmatprep.subr.mxu0 %v975
    %1191 = vmatpush1.msra.mxu0 %v974
    %1192 = vmatprep.mubr.f32.mxu0 %v723
    %1193 = vmatmul.mubr.f32.gmra.mrb[0].mxu0 %v722
    %v1194 = vpop.f32.mrb[0].mxu0
    %v1195 = vadd.f32 %v1111, %v1194
    %v1196 = vpop.f32.mrb[0].mxu0
    %v1197 = vadd.f32 %v1115, %v1196
    %1198 = vmatprep.mubr.f32.mxu0 %v727
    %1199 = vmatmul.mubr.f32.gmra.mrb[0].mxu0 %v726
    %v1200 = vpop.f32.mrb[0].mxu0
    %v1201 = vadd.f32 %v1111, %v1200
    %v1202 = vpop.f32.mrb[0].mxu0
    %v1203 = vadd.f32 %v1115, %v1202
    %1204 = vmatprep.mubr.f32.mxu0 %v731
    %1205 = vmatmul.mubr.f32.gmra.mrb[0].mxu0 %v730
    %v1206 = vpop.f32.mrb[0].mxu0
    %v1207 = vadd.f32 %v1111, %v1206
    %v1208 = vpop.f32.mrb[0].mxu0
    %v1209 = vadd.f32 %v1115, %v1208
    %1210 = vmatprep.mubr.f32.mxu0 %v735
    %1211 = vmatmul.mubr.f32.gmra.mrb[0].mxu0 %v734
    %v1212 = vpop.f32.mrb[0].mxu0
    %v1213 = vadd.f32 %v1111, %v1212
    %v1214 = vpop.f32.mrb[0].mxu0
    %v1215 = vadd.f32 %v1115, %v1214
    %1216 = vmatprep.mubr.f32.mxu0 %v739
    %1217 = vmatmul.mubr.f32.gmra.mrb[0].mxu0 %v738
    %v1218 = vpop.f32.mrb[0].mxu0
    %v1219 = vadd.f32 %v1111, %v1218
    %v1220 = vpop.f32.mrb[0].mxu0
    %v1221 = vadd.f32 %v1115, %v1220
    %1222 = vmatprep.mubr.f32.mxu0 %v743
    %1223 = vmatmul.mubr.f32.gmra.mrb[0].mxu0 %v742
    %v1224 = vpop.f32.mrb[0].mxu0
    %v1225 = vadd.f32 %v1111, %v1224
    %v1226 = vpop.f32.mrb[0].mxu0
    %v1227 = vadd.f32 %v1115, %v1226
    %1228 = vmatprep.mubr.f32.mxu0 %v747
    %1229 = vmatmul.mubr.f32.gmra.mrb[0].mxu0 %v746
    %v1230 = vpop.f32.mrb[0].mxu0
    %v1231 = vadd.f32 %v1111, %v1230
    %v1232 = vpop.f32.mrb[0].mxu0
    %v1233 = vadd.f32 %v1115, %v1232
    %1234 = vmatprep.mubr.f32.mxu0 %v751
    %1235 = vmatmul.mubr.f32.gmra.mrb[0].mxu0 %v750
    %v1236 = vpop.f32.mrb[0].mxu0
    %v1237 = vadd.f32 %v1111, %v1236
    %v1238 = vpop.f32.mrb[0].mxu0
    %v1239 = vadd.f32 %v1115, %v1238
    %1240 = vmatprep.mubr.f32.mxu0 %v755
    %1241 = vmatmul.mubr.f32.gmra.mrb[0].mxu0 %v754
    %v1242 = vpop.f32.mrb[0].mxu0
    %v1243 = vadd.f32 %v1111, %v1242
    %v1244 = vpop.f32.mrb[0].mxu0
    %v1245 = vadd.f32 %v1115, %v1244
    %1246 = vmatprep.mubr.f32.mxu0 %v759
    %1247 = vmatmul.mubr.f32.gmra.mrb[0].mxu0 %v758
    %v1248 = vpop.f32.mrb[0].mxu0
    %v1249 = vadd.f32 %v1111, %v1248
    %v1250 = vpop.f32.mrb[0].mxu0
    %v1251 = vadd.f32 %v1115, %v1250
    %1252 = vmatprep.mubr.f32.mxu0 %v763
    %1253 = vmatmul.mubr.f32.gmra.mrb[0].mxu0 %v762
    %v1254 = vpop.f32.mrb[0].mxu0
    %v1255 = vadd.f32 %v1111, %v1254
    %v1256 = vpop.f32.mrb[0].mxu0
    %v1257 = vadd.f32 %v1115, %v1256
    %1258 = vmatprep.mubr.f32.mxu0 %v767
    %1259 = vmatmul.mubr.f32.gmra.mrb[0].mxu0 %v766
    %v1260 = vpop.f32.mrb[0].mxu0
    %v1261 = vadd.f32 %v1111, %v1260
    %v1262 = vpop.f32.mrb[0].mxu0
    %v1263 = vadd.f32 %v1115, %v1262
    %1264 = vmatprep.mubr.f32.mxu0 %v771
    %1265 = vmatmul.mubr.f32.gmra.mrb[0].mxu0 %v770
    %v1266 = vpop.f32.mrb[0].mxu0
    %v1267 = vadd.f32 %v1111, %v1266
    %v1268 = vpop.f32.mrb[0].mxu0
    %v1269 = vadd.f32 %v1115, %v1268
    %1270 = vmatprep.mubr.f32.mxu0 %v775
    %1271 = vmatmul.mubr.f32.gmra.mrb[0].mxu0 %v774
    %v1272 = vpop.f32.mrb[0].mxu0
    %v1273 = vadd.f32 %v1111, %v1272
    %v1274 = vpop.f32.mrb[0].mxu0
    %v1275 = vadd.f32 %v1115, %v1274
    %1276 = vmatprep.mubr.f32.mxu0 %v779
    %1277 = vmatmul.mubr.f32.gmra.mrb[0].mxu0 %v778
    %v1278 = vpop.f32.mrb[0].mxu0
    %v1279 = vadd.f32 %v1111, %v1278
    %v1280 = vpop.f32.mrb[0].mxu0
    %v1281 = vadd.f32 %v1115, %v1280
    %1282 = vmatprep.mubr.f32.mxu0 %v783
    %1283 = vmatmul.mubr.f32.gmra.mrb[0].mxu0 %v782
    %v1284 = vpop.f32.mrb[0].mxu0
    %v1285 = vadd.f32 %v1111, %v1284
    %v1286 = vpop.f32.mrb[0].mxu0
    %v1287 = vadd.f32 %v1115, %v1286
    %1288 = vmatprep.mubr.f32.mxu0 %v787
    %1289 = vmatmul.mubr.f32.gmra.mrb[0].mxu0 %v786
    %v1290 = vpop.f32.mrb[0].mxu0
    %v1291 = vadd.f32 %v1111, %v1290
    %v1292 = vpop.f32.mrb[0].mxu0
    %v1293 = vadd.f32 %v1115, %v1292
    %1294 = vmatprep.mubr.f32.mxu0 %v791
    %1295 = vmatmul.mubr.f32.gmra.mrb[0].mxu0 %v790
    %v1296 = vpop.f32.mrb[0].mxu0
    %v1297 = vadd.f32 %v1111, %v1296
    %v1298 = vpop.f32.mrb[0].mxu0
    %v1299 = vadd.f32 %v1115, %v1298
    %1300 = vmatprep.mubr.f32.mxu0 %v795
    %1301 = vmatmul.mubr.f32.gmra.mrb[0].mxu0 %v794
    %v1302 = vpop.f32.mrb[0].mxu0
    %v1303 = vadd.f32 %v1111, %v1302
    %v1304 = vpop.f32.mrb[0].mxu0
    %v1305 = vadd.f32 %v1115, %v1304
    %1306 = vmatprep.mubr.f32.mxu0 %v799
    %1307 = vmatmul.mubr.f32.gmra.mrb[0].mxu0 %v798
    %v1308 = vpop.f32.mrb[0].mxu0
    %v1309 = vadd.f32 %v1111, %v1308
    %v1310 = vpop.f32.mrb[0].mxu0
    %v1311 = vadd.f32 %v1115, %v1310
    %1312 = vmatprep.mubr.f32.mxu0 %v803
    %1313 = vmatmul.mubr.f32.gmra.mrb[0].mxu0 %v802
    %v1314 = vpop.f32.mrb[0].mxu0
    %v1315 = vadd.f32 %v1111, %v1314
    %v1316 = vpop.f32.mrb[0].mxu0
    %v1317 = vadd.f32 %v1115, %v1316
    %1318 = vmatprep.mubr.f32.mxu0 %v807
    %1319 = vmatmul.mubr.f32.gmra.mrb[0].mxu0 %v806
    %v1320 = vpop.f32.mrb[0].mxu0
    %v1321 = vadd.f32 %v1111, %v1320
    %v1322 = vpop.f32.mrb[0].mxu0
    %v1323 = vadd.f32 %v1115, %v1322
    %1324 = vmatprep.mubr.f32.mxu0 %v811
    %1325 = vmatmul.mubr.f32.gmra.mrb[0].mxu0 %v810
    %v1326 = vpop.f32.mrb[0].mxu0
    %v1327 = vadd.f32 %v1111, %v1326
    %v1328 = vpop.f32.mrb[0].mxu0
    %v1329 = vadd.f32 %v1115, %v1328
    %1330 = vmatprep.mubr.f32.mxu0 %v815
    %1331 = vmatmul.mubr.f32.gmra.mrb[0].mxu0 %v814
    %v1332 = vpop.f32.mrb[0].mxu0
    %v1333 = vadd.f32 %v1111, %v1332
    %v1334 = vpop.f32.mrb[0].mxu0
    %v1335 = vadd.f32 %v1115, %v1334
    %1336 = vmatprep.mubr.f32.mxu0 %v819
    %1337 = vmatmul.mubr.f32.gmra.mrb[0].mxu0 %v818
    %v1338 = vpop.f32.mrb[0].mxu0
    %v1339 = vadd.f32 %v1111, %v1338
    %v1340 = vpop.f32.mrb[0].mxu0
    %v1341 = vadd.f32 %v1115, %v1340
    %1342 = vmatprep.mubr.f32.mxu0 %v823
    %1343 = vmatmul.mubr.f32.gmra.mrb[0].mxu0 %v822
    %v1344 = vpop.f32.mrb[0].mxu0
    %v1345 = vadd.f32 %v1111, %v1344
    %v1346 = vpop.f32.mrb[0].mxu0
    %v1347 = vadd.f32 %v1115, %v1346
    %1348 = vmatprep.mubr.f32.mxu0 %v827
    %1349 = vmatmul.mubr.f32.gmra.mrb[0].mxu0 %v826
    %v1350 = vpop.f32.mrb[0].mxu0
    %v1351 = vadd.f32 %v1111, %v1350
    %v1352 = vpop.f32.mrb[0].mxu0
    %v1353 = vadd.f32 %v1115, %v1352
    %1354 = vmatprep.mubr.f32.mxu0 %v831
    %1355 = vmatmul.mubr.f32.gmra.mrb[0].mxu0 %v830
    %v1356 = vpop.f32.mrb[0].mxu0
    %v1357 = vadd.f32 %v1111, %v1356
    %v1358 = vpop.f32.mrb[0].mxu0
    %v1359 = vadd.f32 %v1115, %v1358
    %1360 = vmatprep.mubr.f32.mxu0 %v835
    %1361 = vmatmul.mubr.f32.gmra.mrb[0].mxu0 %v834
    %v1362 = vpop.f32.mrb[0].mxu0
    %v1363 = vadd.f32 %v1111, %v1362
    %v1364 = vpop.f32.mrb[0].mxu0
    %v1365 = vadd.f32 %v1115, %v1364
    %1366 = vmatprep.mubr.f32.mxu0 %v839
    %1367 = vmatmul.mubr.f32.gmra.mrb[0].mxu0 %v838
    %v1368 = vpop.f32.mrb[0].mxu0
    %v1369 = vadd.f32 %v1111, %v1368
    %v1370 = vpop.f32.mrb[0].mxu0
    %v1371 = vadd.f32 %v1115, %v1370
    %1372 = vmatprep.mubr.f32.mxu0 %v843
    %1373 = vmatmul.mubr.f32.gmra.mrb[0].mxu0 %v842
    %v1374 = vpop.f32.mrb[0].mxu0
    %v1375 = vadd.f32 %v1111, %v1374
    %v1376 = vpop.f32.mrb[0].mxu0
    %v1377 = vadd.f32 %v1115, %v1376
    %1378 = vmatprep.mubr.f32.mxu0 %v847
    %1379 = vmatmul.mubr.f32.gmra.mrb[0].mxu0 %v846
    %v1380 = vpop.f32.mrb[0].mxu0
    %v1381 = vadd.f32 %v1111, %v1380
    %v1382 = vpop.f32.mrb[0].mxu0
    %v1383 = vadd.f32 %v1115, %v1382
    %1384 = vdwg.mxu0
    %1385 = vmatprep.subr.mxu0 %v979
    %1386 = vmatpush1.msra.mxu0 %v978
    %1387 = vmatprep.subr.mxu0 %v983
    %1388 = vmatpush1.msra.mxu0 %v982
    %1389 = vmatprep.subr.mxu0 %v987
    %1390 = vmatpush1.msra.mxu0 %v986
    %1391 = vmatprep.subr.mxu0 %v991
    %1392 = vmatpush1.msra.mxu0 %v990
    %1393 = vmatprep.subr.mxu0 %v995
    %1394 = vmatpush1.msra.mxu0 %v994
    %1395 = vmatprep.subr.mxu0 %v999
    %1396 = vmatpush1.msra.mxu0 %v998
    %1397 = vmatprep.subr.mxu0 %v1003
    %1398 = vmatpush1.msra.mxu0 %v1002
    %1399 = vmatprep.subr.mxu0 %v1007
    %1400 = vmatpush1.msra.mxu0 %v1006
    %1401 = vmatprep.subr.mxu0 %v1011
    %1402 = vmatpush1.msra.mxu0 %v1010
    %1403 = vmatprep.subr.mxu0 %v1015
    %1404 = vmatpush1.msra.mxu0 %v1014
    %1405 = vmatprep.subr.mxu0 %v1019
    %1406 = vmatpush1.msra.mxu0 %v1018
    %1407 = vmatprep.subr.mxu0 %v1023
    %1408 = vmatpush1.msra.mxu0 %v1022
    %1409 = vmatprep.subr.mxu0 %v1027
    %1410 = vmatpush1.msra.mxu0 %v1026
    %1411 = vmatprep.subr.mxu0 %v1031
    %1412 = vmatpush1.msra.mxu0 %v1030
    %1413 = vmatprep.subr.mxu0 %v1035
    %1414 = vmatpush1.msra.mxu0 %v1034
    %1415 = vmatprep.subr.mxu0 %v1039
    %1416 = vmatpush1.msra.mxu0 %v1038
    %1417 = vmatprep.subr.mxu0 %v1043
    %1418 = vmatpush1.msra.mxu0 %v1042
    %1419 = vmatprep.subr.mxu0 %v1047
    %1420 = vmatpush1.msra.mxu0 %v1046
    %1421 = vmatprep.subr.mxu0 %v1051
    %1422 = vmatpush1.msra.mxu0 %v1050
    %1423 = vmatprep.subr.mxu0 %v1055
    %1424 = vmatpush1.msra.mxu0 %v1054
    %1425 = vmatprep.subr.mxu0 %v1059
    %1426 = vmatpush1.msra.mxu0 %v1058
    %1427 = vmatprep.subr.mxu0 %v1063
    %1428 = vmatpush1.msra.mxu0 %v1062
    %1429 = vmatprep.subr.mxu0 %v1067
    %1430 = vmatpush1.msra.mxu0 %v1066
    %1431 = vmatprep.subr.mxu0 %v1071
    %1432 = vmatpush1.msra.mxu0 %v1070
    %1433 = vmatprep.subr.mxu0 %v1075
    %1434 = vmatpush1.msra.mxu0 %v1074
    %1435 = vmatprep.subr.mxu0 %v1079
    %1436 = vmatpush1.msra.mxu0 %v1078
    %1437 = vmatprep.subr.mxu0 %v1083
    %1438 = vmatpush1.msra.mxu0 %v1082
    %1439 = vmatprep.subr.mxu0 %v1087
    %1440 = vmatpush1.msra.mxu0 %v1086
    %1441 = vmatprep.subr.mxu0 %v1091
    %1442 = vmatpush1.msra.mxu0 %v1090
    %1443 = vmatprep.subr.mxu0 %v1095
    %1444 = vmatpush1.msra.mxu0 %v1094
    %1445 = vmatprep.subr.mxu0 %v1099
    %1446 = vmatpush1.msra.mxu0 %v1098
    %1447 = vmatprep.subr.mxu0 %v1103
    %1448 = vmatpush1.msra.mxu0 %v1102
    %1449 = vmatprep.mubr.f32.mxu0 %v725
    %1450 = vmatmul.mubr.f32.gmra.mrb[0].mxu0 %v724
    %v1451 = vpop.f32.mrb[0].mxu0
    %v1452 = vadd.f32 %v1195, %v1451
    %v1453 = vpop.f32.mrb[0].mxu0
    %v1454 = vadd.f32 %v1197, %v1453
    %1455 = vmatprep.mubr.f32.mxu0 %v729
    %1456 = vmatmul.mubr.f32.gmra.mrb[0].mxu0 %v728
    %v1457 = vpop.f32.mrb[0].mxu0
    %v1458 = vadd.f32 %v1201, %v1457
    %v1459 = vpop.f32.mrb[0].mxu0
    %v1460 = vadd.f32 %v1203, %v1459
    %1461 = vmatprep.mubr.f32.mxu0 %v733
    %1462 = vmatmul.mubr.f32.gmra.mrb[0].mxu0 %v732
    %v1463 = vpop.f32.mrb[0].mxu0
    %v1464 = vadd.f32 %v1207, %v1463
    %v1465 = vpop.f32.mrb[0].mxu0
    %v1466 = vadd.f32 %v1209, %v1465
    %1467 = vmatprep.mubr.f32.mxu0 %v737
    %1468 = vmatmul.mubr.f32.gmra.mrb[0].mxu0 %v736
    %v1469 = vpop.f32.mrb[0].mxu0
    %v1470 = vadd.f32 %v1213, %v1469
    %v1471 = vpop.f32.mrb[0].mxu0
    %v1472 = vadd.f32 %v1215, %v1471
    %1473 = vmatprep.mubr.f32.mxu0 %v741
    %1474 = vmatmul.mubr.f32.gmra.mrb[0].mxu0 %v740
    %v1475 = vpop.f32.mrb[0].mxu0
    %v1476 = vadd.f32 %v1219, %v1475
    %v1477 = vpop.f32.mrb[0].mxu0
    %v1478 = vadd.f32 %v1221, %v1477
    %1479 = vmatprep.mubr.f32.mxu0 %v745
    %1480 = vmatmul.mubr.f32.gmra.mrb[0].mxu0 %v744
    %v1481 = vpop.f32.mrb[0].mxu0
    %v1482 = vadd.f32 %v1225, %v1481
    %v1483 = vpop.f32.mrb[0].mxu0
    %v1484 = vadd.f32 %v1227, %v1483
    %1485 = vmatprep.mubr.f32.mxu0 %v749
    %1486 = vmatmul.mubr.f32.gmra.mrb[0].mxu0 %v748
    %v1487 = vpop.f32.mrb[0].mxu0
    %v1488 = vadd.f32 %v1231, %v1487
    %v1489 = vpop.f32.mrb[0].mxu0
    %v1490 = vadd.f32 %v1233, %v1489
    %1491 = vmatprep.mubr.f32.mxu0 %v753
    %1492 = vmatmul.mubr.f32.gmra.mrb[0].mxu0 %v752
    %v1493 = vpop.f32.mrb[0].mxu0
    %v1494 = vadd.f32 %v1237, %v1493
    %v1495 = vpop.f32.mrb[0].mxu0
    %v1496 = vadd.f32 %v1239, %v1495
    %1497 = vmatprep.mubr.f32.mxu0 %v757
    %1498 = vmatmul.mubr.f32.gmra.mrb[0].mxu0 %v756
    %v1499 = vpop.f32.mrb[0].mxu0
    %v1500 = vadd.f32 %v1243, %v1499
    %v1501 = vpop.f32.mrb[0].mxu0
    %v1502 = vadd.f32 %v1245, %v1501
    %1503 = vmatprep.mubr.f32.mxu0 %v761
    %1504 = vmatmul.mubr.f32.gmra.mrb[0].mxu0 %v760
    %v1505 = vpop.f32.mrb[0].mxu0
    %v1506 = vadd.f32 %v1249, %v1505
    %v1507 = vpop.f32.mrb[0].mxu0
    %v1508 = vadd.f32 %v1251, %v1507
    %1509 = vmatprep.mubr.f32.mxu0 %v765
    %1510 = vmatmul.mubr.f32.gmra.mrb[0].mxu0 %v764
    %v1511 = vpop.f32.mrb[0].mxu0
    %v1512 = vadd.f32 %v1255, %v1511
    %v1513 = vpop.f32.mrb[0].mxu0
    %v1514 = vadd.f32 %v1257, %v1513
    %1515 = vmatprep.mubr.f32.mxu0 %v769
    %1516 = vmatmul.mubr.f32.gmra.mrb[0].mxu0 %v768
    %v1517 = vpop.f32.mrb[0].mxu0
    %v1518 = vadd.f32 %v1261, %v1517
    %v1519 = vpop.f32.mrb[0].mxu0
    %v1520 = vadd.f32 %v1263, %v1519
    %1521 = vmatprep.mubr.f32.mxu0 %v773
    %1522 = vmatmul.mubr.f32.gmra.mrb[0].mxu0 %v772
    %v1523 = vpop.f32.mrb[0].mxu0
    %v1524 = vadd.f32 %v1267, %v1523
    %v1525 = vpop.f32.mrb[0].mxu0
    %v1526 = vadd.f32 %v1269, %v1525
    %1527 = vmatprep.mubr.f32.mxu0 %v777
    %1528 = vmatmul.mubr.f32.gmra.mrb[0].mxu0 %v776
    %v1529 = vpop.f32.mrb[0].mxu0
    %v1530 = vadd.f32 %v1273, %v1529
    %v1531 = vpop.f32.mrb[0].mxu0
    %v1532 = vadd.f32 %v1275, %v1531
    %1533 = vmatprep.mubr.f32.mxu0 %v781
    %1534 = vmatmul.mubr.f32.gmra.mrb[0].mxu0 %v780
    %v1535 = vpop.f32.mrb[0].mxu0
    %v1536 = vadd.f32 %v1279, %v1535
    %v1537 = vpop.f32.mrb[0].mxu0
    %v1538 = vadd.f32 %v1281, %v1537
    %1539 = vmatprep.mubr.f32.mxu0 %v785
    %1540 = vmatmul.mubr.f32.gmra.mrb[0].mxu0 %v784
    %v1541 = vpop.f32.mrb[0].mxu0
    %v1542 = vadd.f32 %v1285, %v1541
    %v1543 = vpop.f32.mrb[0].mxu0
    %v1544 = vadd.f32 %v1287, %v1543
    %1545 = vmatprep.mubr.f32.mxu0 %v789
    %1546 = vmatmul.mubr.f32.gmra.mrb[0].mxu0 %v788
    %v1547 = vpop.f32.mrb[0].mxu0
    %v1548 = vadd.f32 %v1291, %v1547
    %v1549 = vpop.f32.mrb[0].mxu0
    %v1550 = vadd.f32 %v1293, %v1549
    %1551 = vmatprep.mubr.f32.mxu0 %v793
    %1552 = vmatmul.mubr.f32.gmra.mrb[0].mxu0 %v792
    %v1553 = vpop.f32.mrb[0].mxu0
    %v1554 = vadd.f32 %v1297, %v1553
    %v1555 = vpop.f32.mrb[0].mxu0
    %v1556 = vadd.f32 %v1299, %v1555
    %1557 = vmatprep.mubr.f32.mxu0 %v797
    %1558 = vmatmul.mubr.f32.gmra.mrb[0].mxu0 %v796
    %v1559 = vpop.f32.mrb[0].mxu0
    %v1560 = vadd.f32 %v1303, %v1559
    %v1561 = vpop.f32.mrb[0].mxu0
    %v1562 = vadd.f32 %v1305, %v1561
    %1563 = vmatprep.mubr.f32.mxu0 %v801
    %1564 = vmatmul.mubr.f32.gmra.mrb[0].mxu0 %v800
    %v1565 = vpop.f32.mrb[0].mxu0
    %v1566 = vadd.f32 %v1309, %v1565
    %v1567 = vpop.f32.mrb[0].mxu0
    %v1568 = vadd.f32 %v1311, %v1567
    %1569 = vmatprep.mubr.f32.mxu0 %v805
    %1570 = vmatmul.mubr.f32.gmra.mrb[0].mxu0 %v804
    %v1571 = vpop.f32.mrb[0].mxu0
    %v1572 = vadd.f32 %v1315, %v1571
    %v1573 = vpop.f32.mrb[0].mxu0
    %v1574 = vadd.f32 %v1317, %v1573
    %1575 = vmatprep.mubr.f32.mxu0 %v809
    %1576 = vmatmul.mubr.f32.gmra.mrb[0].mxu0 %v808
    %v1577 = vpop.f32.mrb[0].mxu0
    %v1578 = vadd.f32 %v1321, %v1577
    %v1579 = vpop.f32.mrb[0].mxu0
    %v1580 = vadd.f32 %v1323, %v1579
    %1581 = vmatprep.mubr.f32.mxu0 %v813
    %1582 = vmatmul.mubr.f32.gmra.mrb[0].mxu0 %v812
    %v1583 = vpop.f32.mrb[0].mxu0
    %v1584 = vadd.f32 %v1327, %v1583
    %v1585 = vpop.f32.mrb[0].mxu0
    %v1586 = vadd.f32 %v1329, %v1585
    %1587 = vmatprep.mubr.f32.mxu0 %v817
    %1588 = vmatmul.mubr.f32.gmra.mrb[0].mxu0 %v816
    %v1589 = vpop.f32.mrb[0].mxu0
    %v1590 = vadd.f32 %v1333, %v1589
    %v1591 = vpop.f32.mrb[0].mxu0
    %v1592 = vadd.f32 %v1335, %v1591
    %1593 = vmatprep.mubr.f32.mxu0 %v821
    %1594 = vmatmul.mubr.f32.gmra.mrb[0].mxu0 %v820
    %v1595 = vpop.f32.mrb[0].mxu0
    %v1596 = vadd.f32 %v1339, %v1595
    %v1597 = vpop.f32.mrb[0].mxu0
    %v1598 = vadd.f32 %v1341, %v1597
    %1599 = vmatprep.mubr.f32.mxu0 %v825
    %1600 = vmatmul.mubr.f32.gmra.mrb[0].mxu0 %v824
    %v1601 = vpop.f32.mrb[0].mxu0
    %v1602 = vadd.f32 %v1345, %v1601
    %v1603 = vpop.f32.mrb[0].mxu0
    %v1604 = vadd.f32 %v1347, %v1603
    %1605 = vmatprep.mubr.f32.mxu0 %v829
    %1606 = vmatmul.mubr.f32.gmra.mrb[0].mxu0 %v828
    %v1607 = vpop.f32.mrb[0].mxu0
    %v1608 = vadd.f32 %v1351, %v1607
    %v1609 = vpop.f32.mrb[0].mxu0
    %v1610 = vadd.f32 %v1353, %v1609
    %1611 = vmatprep.mubr.f32.mxu0 %v833
    %1612 = vmatmul.mubr.f32.gmra.mrb[0].mxu0 %v832
    %v1613 = vpop.f32.mrb[0].mxu0
    %v1614 = vadd.f32 %v1357, %v1613
    %v1615 = vpop.f32.mrb[0].mxu0
    %v1616 = vadd.f32 %v1359, %v1615
    %1617 = vmatprep.mubr.f32.mxu0 %v837
    %1618 = vmatmul.mubr.f32.gmra.mrb[0].mxu0 %v836
    %v1619 = vpop.f32.mrb[0].mxu0
    %v1620 = vadd.f32 %v1363, %v1619
    %v1621 = vpop.f32.mrb[0].mxu0
    %v1622 = vadd.f32 %v1365, %v1621
    %1623 = vmatprep.mubr.f32.mxu0 %v841
    %1624 = vmatmul.mubr.f32.gmra.mrb[0].mxu0 %v840
    %v1625 = vpop.f32.mrb[0].mxu0
    %v1626 = vadd.f32 %v1369, %v1625
    %v1627 = vpop.f32.mrb[0].mxu0
    %v1628 = vadd.f32 %v1371, %v1627
    %1629 = vmatprep.mubr.f32.mxu0 %v845
    %1630 = vmatmul.mubr.f32.gmra.mrb[0].mxu0 %v844
    %v1631 = vpop.f32.mrb[0].mxu0
    %v1632 = vadd.f32 %v1375, %v1631
    %v1633 = vpop.f32.mrb[0].mxu0
    %v1634 = vadd.f32 %v1377, %v1633
    %1635 = vmatprep.mubr.f32.mxu0 %v849
    %1636 = vmatmul.mubr.f32.gmra.mrb[0].mxu0 %v848
    %v1637 = vpop.f32.mrb[0].mxu0
    %v1638 = vadd.f32 %v1381, %v1637
    %v1639 = vpop.f32.mrb[0].mxu0
    %v1640 = vadd.f32 %v1383, %v1639
    %1641 = vdwg.mxu0
    %1642 = vmatprep.subr.mxu0 %v853
    %1643 = vmatpush1.msra.mxu0 %v852
    %1644 = vmatprep.subr.mxu0 %v857
    %1645 = vmatpush1.msra.mxu0 %v856
    %1646 = vmatprep.subr.mxu0 %v861
    %1647 = vmatpush1.msra.mxu0 %v860
    %1648 = vmatprep.subr.mxu0 %v865
    %1649 = vmatpush1.msra.mxu0 %v864
    %1650 = vmatprep.subr.mxu0 %v869
    %1651 = vmatpush1.msra.mxu0 %v868
    %1652 = vmatprep.subr.mxu0 %v873
    %1653 = vmatpush1.msra.mxu0 %v872
    %1654 = vmatprep.subr.mxu0 %v877
    %1655 = vmatpush1.msra.mxu0 %v876
    %1656 = vmatprep.subr.mxu0 %v881
    %1657 = vmatpush1.msra.mxu0 %v880
    %1658 = vmatprep.subr.mxu0 %v885
    %1659 = vmatpush1.msra.mxu0 %v884
    %1660 = vmatprep.subr.mxu0 %v889
    %1661 = vmatpush1.msra.mxu0 %v888
    %1662 = vmatprep.subr.mxu0 %v893
    %1663 = vmatpush1.msra.mxu0 %v892
    %1664 = vmatprep.subr.mxu0 %v897
    %1665 = vmatpush1.msra.mxu0 %v896
    %1666 = vmatprep.subr.mxu0 %v901
    %1667 = vmatpush1.msra.mxu0 %v900
    %1668 = vmatprep.subr.mxu0 %v905
    %1669 = vmatpush1.msra.mxu0 %v904
    %1670 = vmatprep.subr.mxu0 %v909
    %1671 = vmatpush1.msra.mxu0 %v908
    %1672 = vmatprep.subr.mxu0 %v913
    %1673 = vmatpush1.msra.mxu0 %v912
    %1674 = vmatprep.subr.mxu0 %v917
    %1675 = vmatpush1.msra.mxu0 %v916
    %1676 = vmatprep.subr.mxu0 %v921
    %1677 = vmatpush1.msra.mxu0 %v920
    %1678 = vmatprep.subr.mxu0 %v925
    %1679 = vmatpush1.msra.mxu0 %v924
    %1680 = vmatprep.subr.mxu0 %v929
    %1681 = vmatpush1.msra.mxu0 %v928
    %1682 = vmatprep.subr.mxu0 %v933
    %1683 = vmatpush1.msra.mxu0 %v932
    %1684 = vmatprep.subr.mxu0 %v937
    %1685 = vmatpush1.msra.mxu0 %v936
    %1686 = vmatprep.subr.mxu0 %v941
    %1687 = vmatpush1.msra.mxu0 %v940
    %1688 = vmatprep.subr.mxu0 %v945
    %1689 = vmatpush1.msra.mxu0 %v944
    %1690 = vmatprep.subr.mxu0 %v949
    %1691 = vmatpush1.msra.mxu0 %v948
    %1692 = vmatprep.subr.mxu0 %v953
    %1693 = vmatpush1.msra.mxu0 %v952
    %1694 = vmatprep.subr.mxu0 %v957
    %1695 = vmatpush1.msra.mxu0 %v956
    %1696 = vmatprep.subr.mxu0 %v961
    %1697 = vmatpush1.msra.mxu0 %v960
    %1698 = vmatprep.subr.mxu0 %v965
    %1699 = vmatpush1.msra.mxu0 %v964
    %1700 = vmatprep.subr.mxu0 %v969
    %1701 = vmatpush1.msra.mxu0 %v968
    %1702 = vmatprep.subr.mxu0 %v973
    %1703 = vmatpush1.msra.mxu0 %v972
    %1704 = vmatprep.subr.mxu0 %v977
    %1705 = vmatpush1.msra.mxu0 %v976
    %1706 = vmatprep.mubr.f32.mxu0 %v723
    %1707 = vmatmul.mubr.f32.gmra.mrb[0].mxu0 %v722
    %v1708 = vpop.f32.mrb[0].mxu0
    %v1709 = vadd.f32 %v1119, %v1708
    %v1710 = vpop.f32.mrb[0].mxu0
    %v1711 = vadd.f32 %v1123, %v1710
    %1712 = vmatprep.mubr.f32.mxu0 %v727
    %1713 = vmatmul.mubr.f32.gmra.mrb[0].mxu0 %v726
    %v1714 = vpop.f32.mrb[0].mxu0
    %v1715 = vadd.f32 %v1119, %v1714
    %v1716 = vpop.f32.mrb[0].mxu0
    %v1717 = vadd.f32 %v1123, %v1716
    %1718 = vmatprep.mubr.f32.mxu0 %v731
    %1719 = vmatmul.mubr.f32.gmra.mrb[0].mxu0 %v730
    %v1720 = vpop.f32.mrb[0].mxu0
    %v1721 = vadd.f32 %v1119, %v1720
    %v1722 = vpop.f32.mrb[0].mxu0
    %v1723 = vadd.f32 %v1123, %v1722
    %1724 = vmatprep.mubr.f32.mxu0 %v735
    %1725 = vmatmul.mubr.f32.gmra.mrb[0].mxu0 %v734
    %v1726 = vpop.f32.mrb[0].mxu0
    %v1727 = vadd.f32 %v1119, %v1726
    %v1728 = vpop.f32.mrb[0].mxu0
    %v1729 = vadd.f32 %v1123, %v1728
    %1730 = vmatprep.mubr.f32.mxu0 %v739
    %1731 = vmatmul.mubr.f32.gmra.mrb[0].mxu0 %v738
    %v1732 = vpop.f32.mrb[0].mxu0
    %v1733 = vadd.f32 %v1119, %v1732
    %v1734 = vpop.f32.mrb[0].mxu0
    %v1735 = vadd.f32 %v1123, %v1734
    %1736 = vmatprep.mubr.f32.mxu0 %v743
    %1737 = vmatmul.mubr.f32.gmra.mrb[0].mxu0 %v742
    %v1738 = vpop.f32.mrb[0].mxu0
    %v1739 = vadd.f32 %v1119, %v1738
    %v1740 = vpop.f32.mrb[0].mxu0
    %v1741 = vadd.f32 %v1123, %v1740
    %1742 = vmatprep.mubr.f32.mxu0 %v747
    %1743 = vmatmul.mubr.f32.gmra.mrb[0].mxu0 %v746
    %v1744 = vpop.f32.mrb[0].mxu0
    %v1745 = vadd.f32 %v1119, %v1744
    %v1746 = vpop.f32.mrb[0].mxu0
    %v1747 = vadd.f32 %v1123, %v1746
    %1748 = vmatprep.mubr.f32.mxu0 %v751
    %1749 = vmatmul.mubr.f32.gmra.mrb[0].mxu0 %v750
    %v1750 = vpop.f32.mrb[0].mxu0
    %v1751 = vadd.f32 %v1119, %v1750
    %v1752 = vpop.f32.mrb[0].mxu0
    %v1753 = vadd.f32 %v1123, %v1752
    %1754 = vmatprep.mubr.f32.mxu0 %v755
    %1755 = vmatmul.mubr.f32.gmra.mrb[0].mxu0 %v754
    %v1756 = vpop.f32.mrb[0].mxu0
    %v1757 = vadd.f32 %v1119, %v1756
    %v1758 = vpop.f32.mrb[0].mxu0
    %v1759 = vadd.f32 %v1123, %v1758
    %1760 = vmatprep.mubr.f32.mxu0 %v759
    %1761 = vmatmul.mubr.f32.gmra.mrb[0].mxu0 %v758
    %v1762 = vpop.f32.mrb[0].mxu0
    %v1763 = vadd.f32 %v1119, %v1762
    %v1764 = vpop.f32.mrb[0].mxu0
    %v1765 = vadd.f32 %v1123, %v1764
    %1766 = vmatprep.mubr.f32.mxu0 %v763
    %1767 = vmatmul.mubr.f32.gmra.mrb[0].mxu0 %v762
    %v1768 = vpop.f32.mrb[0].mxu0
    %v1769 = vadd.f32 %v1119, %v1768
    %v1770 = vpop.f32.mrb[0].mxu0
    %v1771 = vadd.f32 %v1123, %v1770
    %1772 = vmatprep.mubr.f32.mxu0 %v767
    %1773 = vmatmul.mubr.f32.gmra.mrb[0].mxu0 %v766
    %v1774 = vpop.f32.mrb[0].mxu0
    %v1775 = vadd.f32 %v1119, %v1774
    %v1776 = vpop.f32.mrb[0].mxu0
    %v1777 = vadd.f32 %v1123, %v1776
    %1778 = vmatprep.mubr.f32.mxu0 %v771
    %1779 = vmatmul.mubr.f32.gmra.mrb[0].mxu0 %v770
    %v1780 = vpop.f32.mrb[0].mxu0
    %v1781 = vadd.f32 %v1119, %v1780
    %v1782 = vpop.f32.mrb[0].mxu0
    %v1783 = vadd.f32 %v1123, %v1782
    %1784 = vmatprep.mubr.f32.mxu0 %v775
    %1785 = vmatmul.mubr.f32.gmra.mrb[0].mxu0 %v774
    %v1786 = vpop.f32.mrb[0].mxu0
    %v1787 = vadd.f32 %v1119, %v1786
    %v1788 = vpop.f32.mrb[0].mxu0
    %v1789 = vadd.f32 %v1123, %v1788
    %1790 = vmatprep.mubr.f32.mxu0 %v779
    %1791 = vmatmul.mubr.f32.gmra.mrb[0].mxu0 %v778
    %v1792 = vpop.f32.mrb[0].mxu0
    %v1793 = vadd.f32 %v1119, %v1792
    %v1794 = vpop.f32.mrb[0].mxu0
    %v1795 = vadd.f32 %v1123, %v1794
    %1796 = vmatprep.mubr.f32.mxu0 %v783
    %1797 = vmatmul.mubr.f32.gmra.mrb[0].mxu0 %v782
    %v1798 = vpop.f32.mrb[0].mxu0
    %v1799 = vadd.f32 %v1119, %v1798
    %v1800 = vpop.f32.mrb[0].mxu0
    %v1801 = vadd.f32 %v1123, %v1800
    %1802 = vmatprep.mubr.f32.mxu0 %v787
    %1803 = vmatmul.mubr.f32.gmra.mrb[0].mxu0 %v786
    %v1804 = vpop.f32.mrb[0].mxu0
    %v1805 = vadd.f32 %v1119, %v1804
    %v1806 = vpop.f32.mrb[0].mxu0
    %v1807 = vadd.f32 %v1123, %v1806
    %1808 = vmatprep.mubr.f32.mxu0 %v791
    %1809 = vmatmul.mubr.f32.gmra.mrb[0].mxu0 %v790
    %v1810 = vpop.f32.mrb[0].mxu0
    %v1811 = vadd.f32 %v1119, %v1810
    %v1812 = vpop.f32.mrb[0].mxu0
    %v1813 = vadd.f32 %v1123, %v1812
    %1814 = vmatprep.mubr.f32.mxu0 %v795
    %1815 = vmatmul.mubr.f32.gmra.mrb[0].mxu0 %v794
    %v1816 = vpop.f32.mrb[0].mxu0
    %v1817 = vadd.f32 %v1119, %v1816
    %v1818 = vpop.f32.mrb[0].mxu0
    %v1819 = vadd.f32 %v1123, %v1818
    %1820 = vmatprep.mubr.f32.mxu0 %v799
    %1821 = vmatmul.mubr.f32.gmra.mrb[0].mxu0 %v798
    %v1822 = vpop.f32.mrb[0].mxu0
    %v1823 = vadd.f32 %v1119, %v1822
    %v1824 = vpop.f32.mrb[0].mxu0
    %v1825 = vadd.f32 %v1123, %v1824
    %1826 = vmatprep.mubr.f32.mxu0 %v803
    %1827 = vmatmul.mubr.f32.gmra.mrb[0].mxu0 %v802
    %v1828 = vpop.f32.mrb[0].mxu0
    %v1829 = vadd.f32 %v1119, %v1828
    %v1830 = vpop.f32.mrb[0].mxu0
    %v1831 = vadd.f32 %v1123, %v1830
    %1832 = vmatprep.mubr.f32.mxu0 %v807
    %1833 = vmatmul.mubr.f32.gmra.mrb[0].mxu0 %v806
    %v1834 = vpop.f32.mrb[0].mxu0
    %v1835 = vadd.f32 %v1119, %v1834
    %v1836 = vpop.f32.mrb[0].mxu0
    %v1837 = vadd.f32 %v1123, %v1836
    %1838 = vmatprep.mubr.f32.mxu0 %v811
    %1839 = vmatmul.mubr.f32.gmra.mrb[0].mxu0 %v810
    %v1840 = vpop.f32.mrb[0].mxu0
    %v1841 = vadd.f32 %v1119, %v1840
    %v1842 = vpop.f32.mrb[0].mxu0
    %v1843 = vadd.f32 %v1123, %v1842
    %1844 = vmatprep.mubr.f32.mxu0 %v815
    %1845 = vmatmul.mubr.f32.gmra.mrb[0].mxu0 %v814
    %v1846 = vpop.f32.mrb[0].mxu0
    %v1847 = vadd.f32 %v1119, %v1846
    %v1848 = vpop.f32.mrb[0].mxu0
    %v1849 = vadd.f32 %v1123, %v1848
    %1850 = vmatprep.mubr.f32.mxu0 %v819
    %1851 = vmatmul.mubr.f32.gmra.mrb[0].mxu0 %v818
    %v1852 = vpop.f32.mrb[0].mxu0
    %v1853 = vadd.f32 %v1119, %v1852
    %v1854 = vpop.f32.mrb[0].mxu0
    %v1855 = vadd.f32 %v1123, %v1854
    %1856 = vmatprep.mubr.f32.mxu0 %v823
    %1857 = vmatmul.mubr.f32.gmra.mrb[0].mxu0 %v822
    %v1858 = vpop.f32.mrb[0].mxu0
    %v1859 = vadd.f32 %v1119, %v1858
    %v1860 = vpop.f32.mrb[0].mxu0
    %v1861 = vadd.f32 %v1123, %v1860
    %1862 = vmatprep.mubr.f32.mxu0 %v827
    %1863 = vmatmul.mubr.f32.gmra.mrb[0].mxu0 %v826
    %v1864 = vpop.f32.mrb[0].mxu0
    %v1865 = vadd.f32 %v1119, %v1864
    %v1866 = vpop.f32.mrb[0].mxu0
    %v1867 = vadd.f32 %v1123, %v1866
    %1868 = vmatprep.mubr.f32.mxu0 %v831
    %1869 = vmatmul.mubr.f32.gmra.mrb[0].mxu0 %v830
    %v1870 = vpop.f32.mrb[0].mxu0
    %v1871 = vadd.f32 %v1119, %v1870
    %v1872 = vpop.f32.mrb[0].mxu0
    %v1873 = vadd.f32 %v1123, %v1872
    %1874 = vmatprep.mubr.f32.mxu0 %v835
    %1875 = vmatmul.mubr.f32.gmra.mrb[0].mxu0 %v834
    %v1876 = vpop.f32.mrb[0].mxu0
    %v1877 = vadd.f32 %v1119, %v1876
    %v1878 = vpop.f32.mrb[0].mxu0
    %v1879 = vadd.f32 %v1123, %v1878
    %1880 = vmatprep.mubr.f32.mxu0 %v839
    %1881 = vmatmul.mubr.f32.gmra.mrb[0].mxu0 %v838
    %v1882 = vpop.f32.mrb[0].mxu0
    %v1883 = vadd.f32 %v1119, %v1882
    %v1884 = vpop.f32.mrb[0].mxu0
    %v1885 = vadd.f32 %v1123, %v1884
    %1886 = vmatprep.mubr.f32.mxu0 %v843
    %1887 = vmatmul.mubr.f32.gmra.mrb[0].mxu0 %v842
    %v1888 = vpop.f32.mrb[0].mxu0
    %v1889 = vadd.f32 %v1119, %v1888
    %v1890 = vpop.f32.mrb[0].mxu0
    %v1891 = vadd.f32 %v1123, %v1890
    %1892 = vmatprep.mubr.f32.mxu0 %v847
    %1893 = vmatmul.mubr.f32.gmra.mrb[0].mxu0 %v846
    %v1894 = vpop.f32.mrb[0].mxu0
    %v1895 = vadd.f32 %v1119, %v1894
    %v1896 = vpop.f32.mrb[0].mxu0
    %v1897 = vadd.f32 %v1123, %v1896
    %1898 = vdwg.mxu0
    %1899 = vmatprep.subr.mxu0 %v981
    %1900 = vmatpush1.msra.mxu0 %v980
    %1901 = vmatprep.subr.mxu0 %v985
    %1902 = vmatpush1.msra.mxu0 %v984
    %1903 = vmatprep.subr.mxu0 %v989
    %1904 = vmatpush1.msra.mxu0 %v988
    %1905 = vmatprep.subr.mxu0 %v993
    %1906 = vmatpush1.msra.mxu0 %v992
    %1907 = vmatprep.subr.mxu0 %v997
    %1908 = vmatpush1.msra.mxu0 %v996
    %1909 = vmatprep.subr.mxu0 %v1001
    %1910 = vmatpush1.msra.mxu0 %v1000
    %1911 = vmatprep.subr.mxu0 %v1005
    %1912 = vmatpush1.msra.mxu0 %v1004
    %1913 = vmatprep.subr.mxu0 %v1009
    %1914 = vmatpush1.msra.mxu0 %v1008
    %1915 = vmatprep.subr.mxu0 %v1013
    %1916 = vmatpush1.msra.mxu0 %v1012
    %1917 = vmatprep.subr.mxu0 %v1017
    %1918 = vmatpush1.msra.mxu0 %v1016
    %1919 = vmatprep.subr.mxu0 %v1021
    %1920 = vmatpush1.msra.mxu0 %v1020
    %1921 = vmatprep.subr.mxu0 %v1025
    %1922 = vmatpush1.msra.mxu0 %v1024
    %1923 = vmatprep.subr.mxu0 %v1029
    %1924 = vmatpush1.msra.mxu0 %v1028
    %1925 = vmatprep.subr.mxu0 %v1033
    %1926 = vmatpush1.msra.mxu0 %v1032
    %1927 = vmatprep.subr.mxu0 %v1037
    %1928 = vmatpush1.msra.mxu0 %v1036
    %1929 = vmatprep.subr.mxu0 %v1041
    %1930 = vmatpush1.msra.mxu0 %v1040
    %1931 = vmatprep.subr.mxu0 %v1045
    %1932 = vmatpush1.msra.mxu0 %v1044
    %1933 = vmatprep.subr.mxu0 %v1049
    %1934 = vmatpush1.msra.mxu0 %v1048
    %1935 = vmatprep.subr.mxu0 %v1053
    %1936 = vmatpush1.msra.mxu0 %v1052
    %1937 = vmatprep.subr.mxu0 %v1057
    %1938 = vmatpush1.msra.mxu0 %v1056
    %1939 = vmatprep.subr.mxu0 %v1061
    %1940 = vmatpush1.msra.mxu0 %v1060
    %1941 = vmatprep.subr.mxu0 %v1065
    %1942 = vmatpush1.msra.mxu0 %v1064
    %1943 = vmatprep.subr.mxu0 %v1069
    %1944 = vmatpush1.msra.mxu0 %v1068
    %1945 = vmatprep.subr.mxu0 %v1073
    %1946 = vmatpush1.msra.mxu0 %v1072
    %1947 = vmatprep.subr.mxu0 %v1077
    %1948 = vmatpush1.msra.mxu0 %v1076
    %1949 = vmatprep.subr.mxu0 %v1081
    %1950 = vmatpush1.msra.mxu0 %v1080
    %1951 = vmatprep.subr.mxu0 %v1085
    %1952 = vmatpush1.msra.mxu0 %v1084
    %1953 = vmatprep.subr.mxu0 %v1089
    %1954 = vmatpush1.msra.mxu0 %v1088
    %1955 = vmatprep.subr.mxu0 %v1093
    %1956 = vmatpush1.msra.mxu0 %v1092
    %1957 = vmatprep.subr.mxu0 %v1097
    %1958 = vmatpush1.msra.mxu0 %v1096
    %1959 = vmatprep.subr.mxu0 %v1101
    %1960 = vmatpush1.msra.mxu0 %v1100
    %1961 = vmatprep.subr.mxu0 %v1105
    %1962 = vmatpush1.msra.mxu0 %v1104
    %1963 = vmatprep.mubr.f32.mxu0 %v725
    %1964 = vmatmul.mubr.f32.gmra.mrb[0].mxu0 %v724
    %v1965 = vpop.f32.mrb[0].mxu0
    %v1966 = vadd.f32 %v1709, %v1965
    %v1967 = vpop.f32.mrb[0].mxu0
    %v1968 = vadd.f32 %v1711, %v1967
    %1969 = vmatprep.mubr.f32.mxu0 %v729
    %1970 = vmatmul.mubr.f32.gmra.mrb[0].mxu0 %v728
    %v1971 = vpop.f32.mrb[0].mxu0
    %v1972 = vadd.f32 %v1715, %v1971
    %v1973 = vpop.f32.mrb[0].mxu0
    %v1974 = vadd.f32 %v1717, %v1973
    %1975 = vmatprep.mubr.f32.mxu0 %v733
    %1976 = vmatmul.mubr.f32.gmra.mrb[0].mxu0 %v732
    %v1977 = vpop.f32.mrb[0].mxu0
    %v1978 = vadd.f32 %v1721, %v1977
    %v1979 = vpop.f32.mrb[0].mxu0
    %v1980 = vadd.f32 %v1723, %v1979
    %1981 = vmatprep.mubr.f32.mxu0 %v737
    %1982 = vmatmul.mubr.f32.gmra.mrb[0].mxu0 %v736
    %v1983 = vpop.f32.mrb[0].mxu0
    %v1984 = vadd.f32 %v1727, %v1983
    %v1985 = vpop.f32.mrb[0].mxu0
    %v1986 = vadd.f32 %v1729, %v1985
    %1987 = vmatprep.mubr.f32.mxu0 %v741
    %1988 = vmatmul.mubr.f32.gmra.mrb[0].mxu0 %v740
    %v1989 = vpop.f32.mrb[0].mxu0
    %v1990 = vadd.f32 %v1733, %v1989
    %v1991 = vpop.f32.mrb[0].mxu0
    %v1992 = vadd.f32 %v1735, %v1991
    %1993 = vmatprep.mubr.f32.mxu0 %v745
    %1994 = vmatmul.mubr.f32.gmra.mrb[0].mxu0 %v744
    %v1995 = vpop.f32.mrb[0].mxu0
    %v1996 = vadd.f32 %v1739, %v1995
    %v1997 = vpop.f32.mrb[0].mxu0
    %v1998 = vadd.f32 %v1741, %v1997
    %1999 = vmatprep.mubr.f32.mxu0 %v749
    %2000 = vmatmul.mubr.f32.gmra.mrb[0].mxu0 %v748
    %v2001 = vpop.f32.mrb[0].mxu0
    %v2002 = vadd.f32 %v1745, %v2001
    %v2003 = vpop.f32.mrb[0].mxu0
    %v2004 = vadd.f32 %v1747, %v2003
    %2005 = vmatprep.mubr.f32.mxu0 %v753
    %2006 = vmatmul.mubr.f32.gmra.mrb[0].mxu0 %v752
    %v2007 = vpop.f32.mrb[0].mxu0
    %v2008 = vadd.f32 %v1751, %v2007
    %v2009 = vpop.f32.mrb[0].mxu0
    %v2010 = vadd.f32 %v1753, %v2009
    %2011 = vmatprep.mubr.f32.mxu0 %v757
    %2012 = vmatmul.mubr.f32.gmra.mrb[0].mxu0 %v756
    %v2013 = vpop.f32.mrb[0].mxu0
    %v2014 = vadd.f32 %v1757, %v2013
    %v2015 = vpop.f32.mrb[0].mxu0
    %v2016 = vadd.f32 %v1759, %v2015
    %2017 = vmatprep.mubr.f32.mxu0 %v761
    %2018 = vmatmul.mubr.f32.gmra.mrb[0].mxu0 %v760
    %v2019 = vpop.f32.mrb[0].mxu0
    %v2020 = vadd.f32 %v1763, %v2019
    %v2021 = vpop.f32.mrb[0].mxu0
    %v2022 = vadd.f32 %v1765, %v2021
    %2023 = vmatprep.mubr.f32.mxu0 %v765
    %2024 = vmatmul.mubr.f32.gmra.mrb[0].mxu0 %v764
    %v2025 = vpop.f32.mrb[0].mxu0
    %v2026 = vadd.f32 %v1769, %v2025
    %v2027 = vpop.f32.mrb[0].mxu0
    %v2028 = vadd.f32 %v1771, %v2027
    %2029 = vmatprep.mubr.f32.mxu0 %v769
    %2030 = vmatmul.mubr.f32.gmra.mrb[0].mxu0 %v768
    %v2031 = vpop.f32.mrb[0].mxu0
    %v2032 = vadd.f32 %v1775, %v2031
    %v2033 = vpop.f32.mrb[0].mxu0
    %v2034 = vadd.f32 %v1777, %v2033
    %2035 = vmatprep.mubr.f32.mxu0 %v773
    %2036 = vmatmul.mubr.f32.gmra.mrb[0].mxu0 %v772
    %v2037 = vpop.f32.mrb[0].mxu0
    %v2038 = vadd.f32 %v1781, %v2037
    %v2039 = vpop.f32.mrb[0].mxu0
    %v2040 = vadd.f32 %v1783, %v2039
    %2041 = vmatprep.mubr.f32.mxu0 %v777
    %2042 = vmatmul.mubr.f32.gmra.mrb[0].mxu0 %v776
    %v2043 = vpop.f32.mrb[0].mxu0
    %v2044 = vadd.f32 %v1787, %v2043
    %v2045 = vpop.f32.mrb[0].mxu0
    %v2046 = vadd.f32 %v1789, %v2045
    %2047 = vmatprep.mubr.f32.mxu0 %v781
    %2048 = vmatmul.mubr.f32.gmra.mrb[0].mxu0 %v780
    %v2049 = vpop.f32.mrb[0].mxu0
    %v2050 = vadd.f32 %v1793, %v2049
    %v2051 = vpop.f32.mrb[0].mxu0
    %v2052 = vadd.f32 %v1795, %v2051
    %2053 = vmatprep.mubr.f32.mxu0 %v785
    %2054 = vmatmul.mubr.f32.gmra.mrb[0].mxu0 %v784
    %v2055 = vpop.f32.mrb[0].mxu0
    %v2056 = vadd.f32 %v1799, %v2055
    %v2057 = vpop.f32.mrb[0].mxu0
    %v2058 = vadd.f32 %v1801, %v2057
    %2059 = vmatprep.mubr.f32.mxu0 %v789
    %2060 = vmatmul.mubr.f32.gmra.mrb[0].mxu0 %v788
    %v2061 = vpop.f32.mrb[0].mxu0
    %v2062 = vadd.f32 %v1805, %v2061
    %v2063 = vpop.f32.mrb[0].mxu0
    %v2064 = vadd.f32 %v1807, %v2063
    %2065 = vmatprep.mubr.f32.mxu0 %v793
    %2066 = vmatmul.mubr.f32.gmra.mrb[0].mxu0 %v792
    %v2067 = vpop.f32.mrb[0].mxu0
    %v2068 = vadd.f32 %v1811, %v2067
    %v2069 = vpop.f32.mrb[0].mxu0
    %v2070 = vadd.f32 %v1813, %v2069
    %2071 = vmatprep.mubr.f32.mxu0 %v797
    %2072 = vmatmul.mubr.f32.gmra.mrb[0].mxu0 %v796
    %v2073 = vpop.f32.mrb[0].mxu0
    %v2074 = vadd.f32 %v1817, %v2073
    %v2075 = vpop.f32.mrb[0].mxu0
    %v2076 = vadd.f32 %v1819, %v2075
    %2077 = vmatprep.mubr.f32.mxu0 %v801
    %2078 = vmatmul.mubr.f32.gmra.mrb[0].mxu0 %v800
    %v2079 = vpop.f32.mrb[0].mxu0
    %v2080 = vadd.f32 %v1823, %v2079
    %v2081 = vpop.f32.mrb[0].mxu0
    %v2082 = vadd.f32 %v1825, %v2081
    %2083 = vmatprep.mubr.f32.mxu0 %v805
    %2084 = vmatmul.mubr.f32.gmra.mrb[0].mxu0 %v804
    %v2085 = vpop.f32.mrb[0].mxu0
    %v2086 = vadd.f32 %v1829, %v2085
    %v2087 = vpop.f32.mrb[0].mxu0
    %v2088 = vadd.f32 %v1831, %v2087
    %2089 = vmatprep.mubr.f32.mxu0 %v809
    %2090 = vmatmul.mubr.f32.gmra.mrb[0].mxu0 %v808
    %v2091 = vpop.f32.mrb[0].mxu0
    %v2092 = vadd.f32 %v1835, %v2091
    %v2093 = vpop.f32.mrb[0].mxu0
    %v2094 = vadd.f32 %v1837, %v2093
    %2095 = vmatprep.mubr.f32.mxu0 %v813
    %2096 = vmatmul.mubr.f32.gmra.mrb[0].mxu0 %v812
    %v2097 = vpop.f32.mrb[0].mxu0
    %v2098 = vadd.f32 %v1841, %v2097
    %v2099 = vpop.f32.mrb[0].mxu0
    %v2100 = vadd.f32 %v1843, %v2099
    %2101 = vmatprep.mubr.f32.mxu0 %v817
    %2102 = vmatmul.mubr.f32.gmra.mrb[0].mxu0 %v816
    %v2103 = vpop.f32.mrb[0].mxu0
    %v2104 = vadd.f32 %v1847, %v2103
    %v2105 = vpop.f32.mrb[0].mxu0
    %v2106 = vadd.f32 %v1849, %v2105
    %2107 = vmatprep.mubr.f32.mxu0 %v821
    %2108 = vmatmul.mubr.f32.gmra.mrb[0].mxu0 %v820
    %v2109 = vpop.f32.mrb[0].mxu0
    %v2110 = vadd.f32 %v1853, %v2109
    %v2111 = vpop.f32.mrb[0].mxu0
    %v2112 = vadd.f32 %v1855, %v2111
    %2113 = vmatprep.mubr.f32.mxu0 %v825
    %2114 = vmatmul.mubr.f32.gmra.mrb[0].mxu0 %v824
    %v2115 = vpop.f32.mrb[0].mxu0
    %v2116 = vadd.f32 %v1859, %v2115
    %v2117 = vpop.f32.mrb[0].mxu0
    %v2118 = vadd.f32 %v1861, %v2117
    %2119 = vmatprep.mubr.f32.mxu0 %v829
    %2120 = vmatmul.mubr.f32.gmra.mrb[0].mxu0 %v828
    %v2121 = vpop.f32.mrb[0].mxu0
    %v2122 = vadd.f32 %v1865, %v2121
    %v2123 = vpop.f32.mrb[0].mxu0
    %v2124 = vadd.f32 %v1867, %v2123
    %2125 = vmatprep.mubr.f32.mxu0 %v833
    %2126 = vmatmul.mubr.f32.gmra.mrb[0].mxu0 %v832
    %v2127 = vpop.f32.mrb[0].mxu0
    %v2128 = vadd.f32 %v1871, %v2127
    %v2129 = vpop.f32.mrb[0].mxu0
    %v2130 = vadd.f32 %v1873, %v2129
    %2131 = vmatprep.mubr.f32.mxu0 %v837
    %2132 = vmatmul.mubr.f32.gmra.mrb[0].mxu0 %v836
    %v2133 = vpop.f32.mrb[0].mxu0
    %v2134 = vadd.f32 %v1877, %v2133
    %v2135 = vpop.f32.mrb[0].mxu0
    %v2136 = vadd.f32 %v1879, %v2135
    %2137 = vmatprep.mubr.f32.mxu0 %v841
    %2138 = vmatmul.mubr.f32.gmra.mrb[0].mxu0 %v840
    %v2139 = vpop.f32.mrb[0].mxu0
    %v2140 = vadd.f32 %v1883, %v2139
    %v2141 = vpop.f32.mrb[0].mxu0
    %v2142 = vadd.f32 %v1885, %v2141
    %2143 = vmatprep.mubr.f32.mxu0 %v845
    %2144 = vmatmul.mubr.f32.gmra.mrb[0].mxu0 %v844
    %v2145 = vpop.f32.mrb[0].mxu0
    %v2146 = vadd.f32 %v1889, %v2145
    %v2147 = vpop.f32.mrb[0].mxu0
    %v2148 = vadd.f32 %v1891, %v2147
    %2149 = vmatprep.mubr.f32.mxu0 %v849
    %2150 = vmatmul.mubr.f32.gmra.mrb[0].mxu0 %v848
    %v2151 = vpop.f32.mrb[0].mxu0
    %v2152 = vadd.f32 %v1895, %v2151
    %v2153 = vpop.f32.mrb[0].mxu0
    %v2154 = vadd.f32 %v1897, %v2153
    %2155 = vdwg.mxu0
    %v2156 = vmax.f32 %v1452, 0.0
    %v2157 = vmax.f32 %v1454, 0.0
    %v2158 = vmax.f32 %v1966, 0.0
    %v2159 = vmax.f32 %v1968, 0.0
    %v2160 = vmax.f32 %v1458, 0.0
    %v2161 = vmax.f32 %v1460, 0.0
    %v2162 = vmax.f32 %v1972, 0.0
    %v2163 = vmax.f32 %v1974, 0.0
    %v2164 = vmax.f32 %v1464, 0.0
    %v2165 = vmax.f32 %v1466, 0.0
    %v2166 = vmax.f32 %v1978, 0.0
    %v2167 = vmax.f32 %v1980, 0.0
    %v2168 = vmax.f32 %v1470, 0.0
    %v2169 = vmax.f32 %v1472, 0.0
    %v2170 = vmax.f32 %v1984, 0.0
    %v2171 = vmax.f32 %v1986, 0.0
    %v2172 = vmax.f32 %v1476, 0.0
    %v2173 = vmax.f32 %v1478, 0.0
    %v2174 = vmax.f32 %v1990, 0.0
    %v2175 = vmax.f32 %v1992, 0.0
    %v2176 = vmax.f32 %v1482, 0.0
    %v2177 = vmax.f32 %v1484, 0.0
    %v2178 = vmax.f32 %v1996, 0.0
    %v2179 = vmax.f32 %v1998, 0.0
    %v2180 = vmax.f32 %v1488, 0.0
    %v2181 = vmax.f32 %v1490, 0.0
    %v2182 = vmax.f32 %v2002, 0.0
    %v2183 = vmax.f32 %v2004, 0.0
    %v2184 = vmax.f32 %v1494, 0.0
    %v2185 = vmax.f32 %v1496, 0.0
    %v2186 = vmax.f32 %v2008, 0.0
    %v2187 = vmax.f32 %v2010, 0.0
    %v2188 = vmax.f32 %v1500, 0.0
    %v2189 = vmax.f32 %v1502, 0.0
    %v2190 = vmax.f32 %v2014, 0.0
    %v2191 = vmax.f32 %v2016, 0.0
    %v2192 = vmax.f32 %v1506, 0.0
    %v2193 = vmax.f32 %v1508, 0.0
    %v2194 = vmax.f32 %v2020, 0.0
    %v2195 = vmax.f32 %v2022, 0.0
    %v2196 = vmax.f32 %v1512, 0.0
    %v2197 = vmax.f32 %v1514, 0.0
    %v2198 = vmax.f32 %v2026, 0.0
    %v2199 = vmax.f32 %v2028, 0.0
    %v2200 = vmax.f32 %v1518, 0.0
    %v2201 = vmax.f32 %v1520, 0.0
    %v2202 = vmax.f32 %v2032, 0.0
    %v2203 = vmax.f32 %v2034, 0.0
    %v2204 = vmax.f32 %v1524, 0.0
    %v2205 = vmax.f32 %v1526, 0.0
    %v2206 = vmax.f32 %v2038, 0.0
    %v2207 = vmax.f32 %v2040, 0.0
    %v2208 = vmax.f32 %v1530, 0.0
    %v2209 = vmax.f32 %v1532, 0.0
    %v2210 = vmax.f32 %v2044, 0.0
    %v2211 = vmax.f32 %v2046, 0.0
    %v2212 = vmax.f32 %v1536, 0.0
    %v2213 = vmax.f32 %v1538, 0.0
    %v2214 = vmax.f32 %v2050, 0.0
    %v2215 = vmax.f32 %v2052, 0.0
    %v2216 = vmax.f32 %v1542, 0.0
    %v2217 = vmax.f32 %v1544, 0.0
    %v2218 = vmax.f32 %v2056, 0.0
    %v2219 = vmax.f32 %v2058, 0.0
    %v2220 = vmax.f32 %v1548, 0.0
    %v2221 = vmax.f32 %v1550, 0.0
    %v2222 = vmax.f32 %v2062, 0.0
    %v2223 = vmax.f32 %v2064, 0.0
    %v2224 = vmax.f32 %v1554, 0.0
    %v2225 = vmax.f32 %v1556, 0.0
    %v2226 = vmax.f32 %v2068, 0.0
    %v2227 = vmax.f32 %v2070, 0.0
    %v2228 = vmax.f32 %v1560, 0.0
    %v2229 = vmax.f32 %v1562, 0.0
    %v2230 = vmax.f32 %v2074, 0.0
    %v2231 = vmax.f32 %v2076, 0.0
    %v2232 = vmax.f32 %v1566, 0.0
    %v2233 = vmax.f32 %v1568, 0.0
    %v2234 = vmax.f32 %v2080, 0.0
    %v2235 = vmax.f32 %v2082, 0.0
    %v2236 = vmax.f32 %v1572, 0.0
    %v2237 = vmax.f32 %v1574, 0.0
    %v2238 = vmax.f32 %v2086, 0.0
    %v2239 = vmax.f32 %v2088, 0.0
    %v2240 = vmax.f32 %v1578, 0.0
    %v2241 = vmax.f32 %v1580, 0.0
    %v2242 = vmax.f32 %v2092, 0.0
    %v2243 = vmax.f32 %v2094, 0.0
    %v2244 = vmax.f32 %v1584, 0.0
    %v2245 = vmax.f32 %v1586, 0.0
    %v2246 = vmax.f32 %v2098, 0.0
    %v2247 = vmax.f32 %v2100, 0.0
    %v2248 = vmax.f32 %v1590, 0.0
    %v2249 = vmax.f32 %v1592, 0.0
    %v2250 = vmax.f32 %v2104, 0.0
    %v2251 = vmax.f32 %v2106, 0.0
    %v2252 = vmax.f32 %v1596, 0.0
    %v2253 = vmax.f32 %v1598, 0.0
    %v2254 = vmax.f32 %v2110, 0.0
    %v2255 = vmax.f32 %v2112, 0.0
    %v2256 = vmax.f32 %v1602, 0.0
    %v2257 = vmax.f32 %v1604, 0.0
    %v2258 = vmax.f32 %v2116, 0.0
    %v2259 = vmax.f32 %v2118, 0.0
    %v2260 = vmax.f32 %v1608, 0.0
    %v2261 = vmax.f32 %v1610, 0.0
    %v2262 = vmax.f32 %v2122, 0.0
    %v2263 = vmax.f32 %v2124, 0.0
    %v2264 = vmax.f32 %v1614, 0.0
    %v2265 = vmax.f32 %v1616, 0.0
    %v2266 = vmax.f32 %v2128, 0.0
    %v2267 = vmax.f32 %v2130, 0.0
    %v2268 = vmax.f32 %v1620, 0.0
    %v2269 = vmax.f32 %v1622, 0.0
    %v2270 = vmax.f32 %v2134, 0.0
    %v2271 = vmax.f32 %v2136, 0.0
    %v2272 = vmax.f32 %v1626, 0.0
    %v2273 = vmax.f32 %v1628, 0.0
    %v2274 = vmax.f32 %v2140, 0.0
    %v2275 = vmax.f32 %v2142, 0.0
    %v2276 = vmax.f32 %v1632, 0.0
    %v2277 = vmax.f32 %v1634, 0.0
    %v2278 = vmax.f32 %v2146, 0.0
    %v2279 = vmax.f32 %v2148, 0.0
    %v2280 = vmax.f32 %v1638, 0.0
    %v2281 = vmax.f32 %v1640, 0.0
    %v2282 = vmax.f32 %v2152, 0.0
    %v2283 = vmax.f32 %v2154, 0.0
    %v2284 = vld [vmem:[%s5] sm:$0xf]
    %s2285 = sld [smem:[#allocation2]]
    %v2286 = vstv %s2285
    %v2288 = vlaneseq
    %v2289 = vshrl.u32 %v2288, 7
    %v2290 = vsub.s32 0, %v2289
    %v2291 = vrot.slane %v2284, %v2290
    %v2292 = vlaneseq
    %v2293 = vshrl.u32 %v2292, 7
    %v2294 = vsub.s32 1, %v2293
    %v2295 = vrot.slane %v2284, %v2294
    %v2296 = vlaneseq
    %v2297 = vshrl.u32 %v2296, 7
    %v2298 = vsub.s32 2, %v2297
    %v2299 = vrot.slane %v2284, %v2298
    %v2300 = vlaneseq
    %v2301 = vshrl.u32 %v2300, 7
    %v2302 = vsub.s32 3, %v2301
    %v2303 = vrot.slane %v2284, %v2302
    %2308 = vmatprep.subr.mxu0 %v2157
    %2309 = vmatpush1.xpose.msra.mxu0 %v2156
    %2310 = vmatprep.subr.mxu0 %v2161
    %2311 = vmatpush1.xpose.msra.mxu0 %v2160
    %2312 = vmatprep.subr.mxu0 %v2165
    %2313 = vmatpush1.xpose.msra.mxu0 %v2164
    %2314 = vmatprep.subr.mxu0 %v2169
    %2315 = vmatpush1.xpose.msra.mxu0 %v2168
    %2316 = vmatprep.subr.mxu0 %v2173
    %2317 = vmatpush1.xpose.msra.mxu0 %v2172
    %2318 = vmatprep.subr.mxu0 %v2177
    %2319 = vmatpush1.xpose.msra.mxu0 %v2176
    %2320 = vmatprep.subr.mxu0 %v2181
    %2321 = vmatpush1.xpose.msra.mxu0 %v2180
    %2322 = vmatprep.subr.mxu0 %v2185
    %2323 = vmatpush1.xpose.msra.mxu0 %v2184
    %2324 = vmatprep.subr.mxu0 %v2189
    %2325 = vmatpush1.xpose.msra.mxu0 %v2188
    %2326 = vmatprep.subr.mxu0 %v2193
    %2327 = vmatpush1.xpose.msra.mxu0 %v2192
    %2328 = vmatprep.subr.mxu0 %v2197
    %2329 = vmatpush1.xpose.msra.mxu0 %v2196
    %2330 = vmatprep.subr.mxu0 %v2201
    %2331 = vmatpush1.xpose.msra.mxu0 %v2200
    %2332 = vmatprep.subr.mxu0 %v2205
    %2333 = vmatpush1.xpose.msra.mxu0 %v2204
    %2334 = vmatprep.subr.mxu0 %v2209
    %2335 = vmatpush1.xpose.msra.mxu0 %v2208
    %2336 = vmatprep.subr.mxu0 %v2213
    %2337 = vmatpush1.xpose.msra.mxu0 %v2212
    %2338 = vmatprep.subr.mxu0 %v2217
    %2339 = vmatpush1.xpose.msra.mxu0 %v2216
    %2340 = vmatprep.subr.mxu0 %v2221
    %2341 = vmatpush1.xpose.msra.mxu0 %v2220
    %2342 = vmatprep.subr.mxu0 %v2225
    %2343 = vmatpush1.xpose.msra.mxu0 %v2224
    %2344 = vmatprep.subr.mxu0 %v2229
    %2345 = vmatpush1.xpose.msra.mxu0 %v2228
    %2346 = vmatprep.subr.mxu0 %v2233
    %2347 = vmatpush1.xpose.msra.mxu0 %v2232
    %2348 = vmatprep.subr.mxu0 %v2237
    %2349 = vmatpush1.xpose.msra.mxu0 %v2236
    %2350 = vmatprep.subr.mxu0 %v2241
    %2351 = vmatpush1.xpose.msra.mxu0 %v2240
    %2352 = vmatprep.subr.mxu0 %v2245
    %2353 = vmatpush1.xpose.msra.mxu0 %v2244
    %2354 = vmatprep.subr.mxu0 %v2249
    %2355 = vmatpush1.xpose.msra.mxu0 %v2248
    %2356 = vmatprep.subr.mxu0 %v2253
    %2357 = vmatpush1.xpose.msra.mxu0 %v2252
    %2358 = vmatprep.subr.mxu0 %v2257
    %2359 = vmatpush1.xpose.msra.mxu0 %v2256
    %2360 = vmatprep.subr.mxu0 %v2261
    %2361 = vmatpush1.xpose.msra.mxu0 %v2260
    %2362 = vmatprep.subr.mxu0 %v2265
    %2363 = vmatpush1.xpose.msra.mxu0 %v2264
    %2364 = vmatprep.subr.mxu0 %v2269
    %2365 = vmatpush1.xpose.msra.mxu0 %v2268
    %2366 = vmatprep.subr.mxu0 %v2273
    %2367 = vmatpush1.xpose.msra.mxu0 %v2272
    %2368 = vmatprep.subr.mxu0 %v2277
    %2369 = vmatpush1.xpose.msra.mxu0 %v2276
    %2370 = vmatprep.subr.mxu0 %v2281
    %2371 = vmatpush1.xpose.msra.mxu0 %v2280
    %2372 = vmatprep.mubr.f32.mxu0 %v2295
    %2373 = vmatmul.mubr.f32.gmra.mrb[0].mxu0 %v2291
    %v2374 = vpop.f32.mrb[0].mxu0
    %v2375 = vadd.f32 %v2286, %v2374
    %v2376 = vpop.f32.mrb[0].mxu0
    %v2377 = vadd.f32 %v2286, %v2376
    %2378 = vdwg.mxu0
    %2379 = vmatprep.subr.mxu0 %v2159
    %2380 = vmatpush1.xpose.msra.mxu0 %v2158
    %2381 = vmatprep.subr.mxu0 %v2163
    %2382 = vmatpush1.xpose.msra.mxu0 %v2162
    %2383 = vmatprep.subr.mxu0 %v2167
    %2384 = vmatpush1.xpose.msra.mxu0 %v2166
    %2385 = vmatprep.subr.mxu0 %v2171
    %2386 = vmatpush1.xpose.msra.mxu0 %v2170
    %2387 = vmatprep.subr.mxu0 %v2175
    %2388 = vmatpush1.xpose.msra.mxu0 %v2174
    %2389 = vmatprep.subr.mxu0 %v2179
    %2390 = vmatpush1.xpose.msra.mxu0 %v2178
    %2391 = vmatprep.subr.mxu0 %v2183
    %2392 = vmatpush1.xpose.msra.mxu0 %v2182
    %2393 = vmatprep.subr.mxu0 %v2187
    %2394 = vmatpush1.xpose.msra.mxu0 %v2186
    %2395 = vmatprep.subr.mxu0 %v2191
    %2396 = vmatpush1.xpose.msra.mxu0 %v2190
    %2397 = vmatprep.subr.mxu0 %v2195
    %2398 = vmatpush1.xpose.msra.mxu0 %v2194
    %2399 = vmatprep.subr.mxu0 %v2199
    %2400 = vmatpush1.xpose.msra.mxu0 %v2198
    %2401 = vmatprep.subr.mxu0 %v2203
    %2402 = vmatpush1.xpose.msra.mxu0 %v2202
    %2403 = vmatprep.subr.mxu0 %v2207
    %2404 = vmatpush1.xpose.msra.mxu0 %v2206
    %2405 = vmatprep.subr.mxu0 %v2211
    %2406 = vmatpush1.xpose.msra.mxu0 %v2210
    %2407 = vmatprep.subr.mxu0 %v2215
    %2408 = vmatpush1.xpose.msra.mxu0 %v2214
    %2409 = vmatprep.subr.mxu0 %v2219
    %2410 = vmatpush1.xpose.msra.mxu0 %v2218
    %2411 = vmatprep.subr.mxu0 %v2223
    %2412 = vmatpush1.xpose.msra.mxu0 %v2222
    %2413 = vmatprep.subr.mxu0 %v2227
    %2414 = vmatpush1.xpose.msra.mxu0 %v2226
    %2415 = vmatprep.subr.mxu0 %v2231
    %2416 = vmatpush1.xpose.msra.mxu0 %v2230
    %2417 = vmatprep.subr.mxu0 %v2235
    %2418 = vmatpush1.xpose.msra.mxu0 %v2234
    %2419 = vmatprep.subr.mxu0 %v2239
    %2420 = vmatpush1.xpose.msra.mxu0 %v2238
    %2421 = vmatprep.subr.mxu0 %v2243
    %2422 = vmatpush1.xpose.msra.mxu0 %v2242
    %2423 = vmatprep.subr.mxu0 %v2247
    %2424 = vmatpush1.xpose.msra.mxu0 %v2246
    %2425 = vmatprep.subr.mxu0 %v2251
    %2426 = vmatpush1.xpose.msra.mxu0 %v2250
    %2427 = vmatprep.subr.mxu0 %v2255
    %2428 = vmatpush1.xpose.msra.mxu0 %v2254
    %2429 = vmatprep.subr.mxu0 %v2259
    %2430 = vmatpush1.xpose.msra.mxu0 %v2258
    %2431 = vmatprep.subr.mxu0 %v2263
    %2432 = vmatpush1.xpose.msra.mxu0 %v2262
    %2433 = vmatprep.subr.mxu0 %v2267
    %2434 = vmatpush1.xpose.msra.mxu0 %v2266
    %2435 = vmatprep.subr.mxu0 %v2271
    %2436 = vmatpush1.xpose.msra.mxu0 %v2270
    %2437 = vmatprep.subr.mxu0 %v2275
    %2438 = vmatpush1.xpose.msra.mxu0 %v2274
    %2439 = vmatprep.subr.mxu0 %v2279
    %2440 = vmatpush1.xpose.msra.mxu0 %v2278
    %2441 = vmatprep.subr.mxu0 %v2283
    %2442 = vmatpush1.xpose.msra.mxu0 %v2282
    %2443 = vmatprep.mubr.f32.mxu0 %v2303
    %2444 = vmatmul.mubr.f32.gmra.mrb[0].mxu0 %v2299
    %v2445 = vpop.f32.mrb[0].mxu0
    %v2446 = vadd.f32 %v2375, %v2445
    %v2447 = vpop.f32.mrb[0].mxu0
    %v2448 = vadd.f32 %v2377, %v2447
    %2449 = vdwg.mxu0
    %v2452 = vcombine.low %v2446, %v2448
    %v2454 = vunpack.c.l.s4 1966171168
    %v2455 = vunpack.c.0.s8 %v2454
    %v2456 = vlaneseq
    %v2457 = vshrl.u32 %v2456, 7
    %v2458 = vsub.s32 %v2455, %v2457
    %v2459 = vrot.slane %v2452, %v2458
    %v2461 = vunpack.c.l.s4 1966171168
    %v2462 = vunpack.c.0.s8 %v2461
    %v2463 = vlaneseq
    %v2464 = vshrl.u32 %v2463, 7
    %v2465 = vsub.s32 %v2462, %v2464
    %v2466 = vrot.slane %v2459, %v2465
    %v2468 = vlaneseq
    %vm2469 = vcmp.ge.s32.totalorder %v2468, 0
    %vm2470 = vcmp.lt.s32.totalorder %v2468, 256
    %vm2471 = vmand %vm2469, %vm2470
    %2472 = vst.msk [vmem:[%s7] sm:$0x3] %vm2471, %v2466
    // Predicated region
    $region34: #{_soft_q_impl.1} parent=1 // pred_check
      _
    $region35: #{_soft_q_impl.1} parent=1 // pred_check_branch
      %2474 = sbr.rel (0) target = $region37
    $region36: #{_soft_q_impl.1} parent=1 // pred_region
      _
    $region37: #{_soft_q_impl.1} parent=1 // pred_fallthru
      _
    // Predicated region
    $region38: #{_soft_q_impl.1} parent=1 // pred_check
      _
    $region39: #{_soft_q_impl.1} parent=1 // pred_check_branch
      %2476 = sbr.rel (0) target = $region41
    $region40: #{_soft_q_impl.1} parent=1 // pred_region
      _
    $region41: #{_soft_q_impl.1} parent=1 // pred_fallthru
      _
    %2477 = vsyncpa [#allocation4], 1

</llo_original>
